<compile_context>
chip_gen: v7x
topology: tpu7x:2x2x1
jax: 0.10.0
libtpu: 0.0.40
codegen_flags: <defaults>
</compile_context>

<pallas_src>
import functools

import jax
import jax.numpy as jnp
from jax import lax
from jax.experimental import pallas as pl
from jax.experimental.pallas import tpu as pltpu


# ---------------------------------------------------------------------------
# Fused kernel: depthwise 3x3 conv + batch stats (phase 0) + BN affine (phase 1)
# ---------------------------------------------------------------------------
def _fused_dwconv_bn_kernel(x_ref, w_ref, gb_ref, out_ref, stats_ref, ss_ref,
                            *, H, W, TH, inv_count, eps):
    # x_ref:     (H, W+2, C)  bf16   whole W-padded image of batch element n
    # w_ref:     (3, 3, C)    f32    depthwise taps
    # gb_ref:    (2, C)       f32    [gamma, beta]
    # out_ref:   (TH, W, C)   f32    normalized output rows of this slab
    # stats_ref: (2, C)       f32    VMEM scratch: [sum, sumsq]  (phase 0)
    # ss_ref:    (2, C)       f32    VMEM scratch: [scale, shift] (phase 1)
    phase = pl.program_id(0)
    n = pl.program_id(1)
    ht = pl.program_id(2)
    C = out_ref.shape[-1]

    first = jnp.logical_and(n == 0, ht == 0)

    @pl.when(jnp.logical_and(phase == 0, first))
    def _init_stats():
        stats_ref[...] = jnp.zeros_like(stats_ref)

    @pl.when(jnp.logical_and(phase == 1, first))
    def _finalize_stats():
        # Batch statistics -> BN scale/shift, computed once, kept in VMEM.
        mean = stats_ref[0:1, :] * inv_count
        var = stats_ref[1:2, :] * inv_count - mean * mean      # biased variance
        scale = gb_ref[0:1, :] * lax.rsqrt(var + eps)
        ss_ref[0:1, :] = scale
        ss_ref[1:2, :] = gb_ref[1:2, :] - mean * scale

    w_all = w_ref[...]          # (3, 3, C) f32, loaded once per grid step
    r0 = ht * TH                # first output row of this slab

    def conv_row(r):
        # 3x3 depthwise conv for one output row r (global index, traced).
        # W boundary comes from the zero halo columns already in x_ref;
        # H boundary is handled by clamping the row index and zeroing the
        # corresponding tap weights.
        acc = jnp.zeros((W, C), jnp.float32)
        for kh in range(3):                                   # static unroll
            src = r + (kh - 1)
            valid_f = jnp.where(jnp.logical_and(src >= 0, src < H),
                                jnp.float32(1.0), jnp.float32(0.0))
            srcc = jnp.clip(src, 0, H - 1)
            rowf = x_ref[srcc, :, :].astype(jnp.float32)      # (W+2, C)
            wk = w_all[kh] * valid_f                          # (3, C) masked taps
            for kw in range(3):                               # static unroll
                acc = acc + rowf[kw:kw + W, :] * wk[kw:kw + 1, :]
        return acc

    @pl.when(phase == 0)
    def _phase0():
        def body(j, carry):
            s, ss = carry
            y = conv_row(r0 + j)
            s = s + jnp.sum(y, axis=0, keepdims=True)
            ss = ss + jnp.sum(y * y, axis=0, keepdims=True)
            return (s, ss)

        zero = jnp.zeros((1, C), jnp.float32)
        s, ss = lax.fori_loop(0, TH, body, (zero, zero))
        stats_ref[0:1, :] = stats_ref[0:1, :] + s
        stats_ref[1:2, :] = stats_ref[1:2, :] + ss

    @pl.when(phase == 1)
    def _phase1():
        scale = ss_ref[0:1, :]
        shift = ss_ref[1:2, :]

        def body(j, carry):
            y = conv_row(r0 + j)
            out_ref[j, :, :] = y * scale + shift
            return carry

        lax.fori_loop(0, TH, body, 0)


# ---------------------------------------------------------------------------
# Wrapper: NCHW in, NCHW out (matches the PyTorch module semantics).
# ---------------------------------------------------------------------------
def depthwise_conv_bn(x_nchw, w_oihw, gamma, beta, eps=1e-3, block_rows=8):
    N, C, H, W = x_nchw.shape

    # Single layout pass over x: NCHW -> NHWC, cast storage to bf16, and add a
    # 1-column zero halo on each side of W (the only padding the kernel needs).
    x = jnp.transpose(x_nchw, (0, 2, 3, 1)).astype(jnp.bfloat16)
    xw = jnp.pad(x, ((0, 0), (0, 0), (1, 1), (0, 0)))          # (N, H, W+2, C)
    w = jnp.transpose(w_oihw[:, 0, :, :], (1, 2, 0)).astype(jnp.float32)  # (3,3,C)
    gb = jnp.stack([gamma.astype(jnp.float32), beta.astype(jnp.float32)], axis=0)

    # Output row-slab height: largest divisor of H that is <= block_rows.
    TH = min(block_rows, H)
    while H % TH:
        TH -= 1
    grid = (2, N, H // TH)                                     # (phase, n, h-tile)

    kernel = functools.partial(
        _fused_dwconv_bn_kernel, H=H, W=W, TH=TH,
        inv_count=1.0 / float(N * H * W), eps=float(eps))

    out = pl.pallas_call(
        kernel,
        out_shape=jax.ShapeDtypeStruct((N, H, W, C), jnp.float32),
        grid_spec=pltpu.PrefetchScalarGridSpec(
            num_scalar_prefetch=0,
            grid=grid,
            in_specs=[
                # Whole image of batch element n (DMA'd once per (phase, n)).
                pl.BlockSpec((None, H, W + 2, C), lambda p, n, h: (n, 0, 0, 0)),
                pl.BlockSpec((3, 3, C), lambda p, n, h: (0, 0, 0)),
                pl.BlockSpec((2, C), lambda p, n, h: (0, 0)),
            ],
            # Phase 0 never writes the output: keep its block index constant so
            # no garbage write-backs happen; phase 1 visits every (n, h) slab.
            out_specs=pl.BlockSpec((None, TH, W, C),
                                   lambda p, n, h: (p * n, p * h, 0, 0)),
            scratch_shapes=[pltpu.VMEM((2, C), jnp.float32),   # sum / sumsq
                            pltpu.VMEM((2, C), jnp.float32)]), # scale / shift
        compiler_params=pltpu.CompilerParams(
            # Shared resident stats scratch + phase dependency => sequential grid.
            # TODO(synk): emit per-core stats partials to use both v7x TensorCores.
            dimension_semantics=("arbitrary", "arbitrary", "arbitrary"),
            vmem_limit_bytes=48 * 1024 * 1024),
    )(xw, w, gb)

    # TODO(synk): BatchNorm2d(track_running_stats=True) also updates
    # running_mean/running_var (momentum=0.01, unbiased var); the forward
    # output does not depend on them in training mode, so they are not emitted.
    return jnp.transpose(out, (0, 3, 1, 2))                    # back to NCHW


# ---------------------------------------------------------------------------
# Pure-JAX reference (same effective precision: bf16-stored activations,
# f32 math) for correctness checking.
# ---------------------------------------------------------------------------
def reference(x_nchw, w_oihw, gamma, beta, eps=1e-3):
    x = x_nchw.astype(jnp.bfloat16).astype(jnp.float32)        # match bf16 storage
    y = lax.conv_general_dilated(
        x, w_oihw.astype(jnp.float32),
        window_strides=(1, 1), padding=((1, 1), (1, 1)),
        dimension_numbers=('NCHW', 'OIHW', 'NCHW'),
        feature_group_count=x_nchw.shape[1],
        precision=lax.Precision.HIGHEST)
    mean = jnp.mean(y, axis=(0, 2, 3), keepdims=True)
    var = jnp.mean(jnp.square(y - mean), axis=(0, 2, 3), keepdims=True)
    return ((y - mean) * lax.rsqrt(var + eps) * gamma[None, :, None, None]
            + beta[None, :, None, None])


if __name__ == "__main__":
    C = 288                       # fixed by the module (Conv2d/BatchNorm2d channels)
    N, H, W = 2, 16, 16           # small batch / spatial for the demo

    key = jax.random.PRNGKey(0)
    kx, kw_, kg, kb = jax.random.split(key, 4)

    x = jax.random.normal(kx, (N, C, H, W), jnp.float32)
    # depthwise weight: (out=C, in/groups=1, kh=3, kw=3)
    w = jax.random.normal(kw_, (C, 1, 3, 3), jnp.float32) * 0.1
    gamma = 1.0 + 0.1 * jax.random.normal(kg, (C,), jnp.float32)
    beta = 0.1 * jax.random.normal(kb, (C,), jnp.float32)

    out = jax.jit(depthwise_conv_bn)(x, w, gamma, beta)
    out = jax.block_until_ready(out)

    ref = reference(x, w, gamma, beta, eps=1e-3)
    assert out.shape == (N, C, H, W)
    max_err = jnp.max(jnp.abs(out - ref))
    assert jnp.allclose(out, ref, atol=1e-3, rtol=1e-3), \
        f"mismatch vs reference (max abs err {max_err})"

    print("KERNEL_OK")
</pallas_src>

<mosaic_0001>
module attributes {stable_mosaic.version = 11 : i64} {
  func.func @_fused_dwconv_bn_kernel(%arg0: i32, %arg1: i32, %arg2: i32, %arg3: memref<1x16x18x288xbf16, #tpu.memory_space<vmem>>, %arg4: memref<3x3x288xf32, #tpu.memory_space<vmem>>, %arg5: memref<2x288xf32, #tpu.memory_space<vmem>>, %arg6: memref<1x8x16x288xf32, #tpu.memory_space<vmem>>, %arg7: memref<2x288xf32, #tpu.memory_space<vmem>>, %arg8: memref<2x288xf32, #tpu.memory_space<vmem>>) attributes {dimension_semantics = [#tpu.dimension_semantics<arbitrary>, #tpu.dimension_semantics<arbitrary>, #tpu.dimension_semantics<arbitrary>], iteration_bounds = array<i64: 2, 2, 2>, scalar_prefetch = 0 : i64, scratch_operands = 2 : i64, tpu.core_type = #tpu.core_type<tc>, window_params = [{transform_indices = @transform_0, window_bounds = array<i64: 1, 16, 18, 288>}, {pipeline_mode = #tpu.pipeline_mode<synchronous>, transform_indices = @transform_1, window_bounds = array<i64: 3, 3, 288>}, {pipeline_mode = #tpu.pipeline_mode<synchronous>, transform_indices = @transform_2, window_bounds = array<i64: 2, 288>}, {transform_indices = @transform_3, window_bounds = array<i64: 1, 8, 16, 288>}]} {
    %c0_i32 = arith.constant 0 : i32
    %0 = arith.cmpi eq, %arg1, %c0_i32 : i32
    %c0_i32_0 = arith.constant 0 : i32
    %1 = arith.cmpi eq, %arg2, %c0_i32_0 : i32
    %2 = arith.andi %0, %1 : i1
    %c0_i32_1 = arith.constant 0 : i32
    %3 = arith.cmpi eq, %arg0, %c0_i32_1 : i32
    %4 = arith.andi %3, %2 : i1
    %5 = arith.extui %4 : i1 to i32
    %c0_i32_2 = arith.constant 0 : i32
    %6 = arith.cmpi ne, %5, %c0_i32_2 : i32
    scf.if %6 {
      %cst = arith.constant 0.000000e+00 : f32
      %19 = vector.broadcast %cst : f32 to vector<2x288xf32>
      %c0_10 = arith.constant 0 : index
      %c0_11 = arith.constant 0 : index
      %20 = vector.load %arg7[%c0_10, %c0_11] : memref<2x288xf32, #tpu.memory_space<vmem>>, vector<2x288xf32>
      tpu.vector_store %arg7[%c0_10, %c0_11], %19 {strides = array<i32>} : memref<2x288xf32, #tpu.memory_space<vmem>>, vector<2x288xf32>,
    } else {
    }
    %c1_i32 = arith.constant 1 : i32
    %7 = arith.cmpi eq, %arg0, %c1_i32 : i32
    %8 = arith.andi %7, %2 : i1
    %9 = arith.extui %8 : i1 to i32
    %c0_i32_3 = arith.constant 0 : i32
    %10 = arith.cmpi ne, %9, %c0_i32_3 : i32
    scf.if %10 {
      %c0_10 = arith.constant 0 : index
      %c0_11 = arith.constant 0 : index
      %19 = vector.load %arg7[%c0_10, %c0_11] : memref<2x288xf32, #tpu.memory_space<vmem>>, vector<1x288xf32>
      %cst = arith.constant 0.001953125 : f32
      %20 = vector.broadcast %cst : f32 to vector<1x288xf32>
      %21 = arith.mulf %19, %20 : vector<1x288xf32>
      %c1 = arith.constant 1 : index
      %c0_12 = arith.constant 0 : index
      %22 = vector.load %arg7[%c1, %c0_12] : memref<2x288xf32, #tpu.memory_space<vmem>>, vector<1x288xf32>
      %cst_13 = arith.constant 0.001953125 : f32
      %23 = vector.broadcast %cst_13 : f32 to vector<1x288xf32>
      %24 = arith.mulf %22, %23 : vector<1x288xf32>
      %25 = arith.mulf %21, %21 : vector<1x288xf32>
      %26 = arith.subf %24, %25 : vector<1x288xf32>
      %c0_14 = arith.constant 0 : index
      %c0_15 = arith.constant 0 : index
      %27 = vector.load %arg5[%c0_14, %c0_15] : memref<2x288xf32, #tpu.memory_space<vmem>>, vector<1x288xf32>
      %cst_16 = arith.constant 1.000000e-03 : f32
      %28 = vector.broadcast %cst_16 : f32 to vector<1x288xf32>
      %29 = arith.addf %26, %28 : vector<1x288xf32>
      %30 = math.rsqrt %29 : vector<1x288xf32>
      %31 = arith.mulf %27, %30 : vector<1x288xf32>
      %c0_17 = arith.constant 0 : index
      %c0_18 = arith.constant 0 : index
      %32 = vector.load %arg8[%c0_17, %c0_18] : memref<2x288xf32, #tpu.memory_space<vmem>>, vector<1x288xf32>
      tpu.vector_store %arg8[%c0_17, %c0_18], %31 {strides = array<i32>} : memref<2x288xf32, #tpu.memory_space<vmem>>, vector<1x288xf32>,
      %c1_19 = arith.constant 1 : index
      %c0_20 = arith.constant 0 : index
      %33 = vector.load %arg5[%c1_19, %c0_20] : memref<2x288xf32, #tpu.memory_space<vmem>>, vector<1x288xf32>
      %34 = arith.mulf %21, %31 : vector<1x288xf32>
      %35 = arith.subf %33, %34 : vector<1x288xf32>
      %c1_21 = arith.constant 1 : index
      %c0_22 = arith.constant 0 : index
      %36 = vector.load %arg8[%c1_21, %c0_22] : memref<2x288xf32, #tpu.memory_space<vmem>>, vector<1x288xf32>
      tpu.vector_store %arg8[%c1_21, %c0_22], %35 {strides = array<i32>} : memref<2x288xf32, #tpu.memory_space<vmem>>, vector<1x288xf32>,
    } else {
    }
    %c0 = arith.constant 0 : index
    %c0_4 = arith.constant 0 : index
    %c0_5 = arith.constant 0 : index
    %11 = vector.load %arg4[%c0, %c0_4, %c0_5] : memref<3x3x288xf32, #tpu.memory_space<vmem>>, vector<3x3x288xf32>
    %c8_i32 = arith.constant 8 : i32
    %12 = arith.muli %arg2, %c8_i32 : i32
    %c0_i32_6 = arith.constant 0 : i32
    %13 = arith.cmpi eq, %arg0, %c0_i32_6 : i32
    %14 = arith.extui %13 : i1 to i32
    %c0_i32_7 = arith.constant 0 : i32
    %15 = arith.cmpi ne, %14, %c0_i32_7 : i32
    scf.if %15 {
      %cst = arith.constant 0.000000e+00 : f32
      %19 = vector.broadcast %cst : f32 to vector<1x288xf32>
      %c0_i32_10 = arith.constant 0 : i32
      %c8_i32_11 = arith.constant 8 : i32
      %20 = arith.addi %c0_i32_10, %c8_i32_11 : i32
      %c1_i32_12 = arith.constant 1 : i32
      %21:2 = scf.for %arg9 = %c0_i32_10 to %20 step %c1_i32_12 iter_args(%arg10 = %19, %arg11 = %19) -> (vector<1x288xf32>, vector<1x288xf32>)  : i32 {
        %28 = arith.addi %12, %arg9 : i32
        %cst_21 = arith.constant 0.000000e+00 : f32
        %29 = vector.broadcast %cst_21 : f32 to vector<16x288xf32>
        %c-1_i32 = arith.constant -1 : i32
        %30 = arith.addi %28, %c-1_i32 : i32
        %c0_i32_22 = arith.constant 0 : i32
        %31 = arith.cmpi sge, %30, %c0_i32_22 : i32
        %c16_i32 = arith.constant 16 : i32
        %32 = arith.cmpi slt, %30, %c16_i32 : i32
        %33 = arith.andi %31, %32 : i1
        %cst_23 = arith.constant 1.000000e+00 : f32
        %cst_24 = arith.constant 0.000000e+00 : f32
        %34 = arith.select %33, %cst_23, %cst_24 : f32
        %c0_i32_25 = arith.constant 0 : i32
        %c15_i32 = arith.constant 15 : i32
        %35 = arith.maxsi %c0_i32_25, %30 : i32
        %36 = arith.minsi %c15_i32, %35 : i32
        %c0_26 = arith.constant 0 : index
        %37 = arith.index_cast %36 : i32 to index
        %c0_27 = arith.constant 0 : index
        %c0_28 = arith.constant 0 : index
        %38 = vector.load %arg3[%c0_26, %37, %c0_27, %c0_28] : memref<1x16x18x288xbf16, #tpu.memory_space<vmem>>, vector<1x1x18x288xbf16>
        %39 = vector.shape_cast %38 : vector<1x1x18x288xbf16> to vector<18x288xbf16>
        %40 = arith.extf %39 : vector<18x288xbf16> to vector<18x288xf32>
        %41 = vector.extract_strided_slice %11 {offsets = [0, 0, 0], sizes = [1, 3, 288], strides = [1, 1, 1]} : vector<3x3x288xf32> to vector<1x3x288xf32>
        %42 = vector.shape_cast %41 : vector<1x3x288xf32> to vector<3x288xf32>
        %43 = vector.broadcast %34 : f32 to vector<3x288xf32>
        %44 = arith.mulf %42, %43 : vector<3x288xf32>
        %45 = vector.extract_strided_slice %40 {offsets = [0, 0], sizes = [16, 288], strides = [1, 1]} : vector<18x288xf32> to vector<16x288xf32>
        %46 = vector.extract_strided_slice %44 {offsets = [0, 0], sizes = [1, 288], strides = [1, 1]} : vector<3x288xf32> to vector<1x288xf32>
        %47 = vector.broadcast %46 : vector<1x288xf32> to vector<16x288xf32>
        %48 = arith.mulf %45, %47 : vector<16x288xf32>
        %49 = arith.addf %29, %48 : vector<16x288xf32>
        %50 = vector.extract_strided_slice %40 {offsets = [1, 0], sizes = [16, 288], strides = [1, 1]} : vector<18x288xf32> to vector<16x288xf32>
        %51 = vector.extract_strided_slice %44 {offsets = [1, 0], sizes = [1, 288], strides = [1, 1]} : vector<3x288xf32> to vector<1x288xf32>
        %52 = vector.broadcast %51 : vector<1x288xf32> to vector<16x288xf32>
        %53 = arith.mulf %50, %52 : vector<16x288xf32>
        %54 = arith.addf %49, %53 : vector<16x288xf32>
        %55 = vector.extract_strided_slice %40 {offsets = [2, 0], sizes = [16, 288], strides = [1, 1]} : vector<18x288xf32> to vector<16x288xf32>
        %56 = vector.extract_strided_slice %44 {offsets = [2, 0], sizes = [1, 288], strides = [1, 1]} : vector<3x288xf32> to vector<1x288xf32>
        %57 = vector.broadcast %56 : vector<1x288xf32> to vector<16x288xf32>
        %58 = arith.mulf %55, %57 : vector<16x288xf32>
        %59 = arith.addf %54, %58 : vector<16x288xf32>
        %c0_i32_29 = arith.constant 0 : i32
        %60 = arith.addi %28, %c0_i32_29 : i32
        %c0_i32_30 = arith.constant 0 : i32
        %61 = arith.cmpi sge, %60, %c0_i32_30 : i32
        %c16_i32_31 = arith.constant 16 : i32
        %62 = arith.cmpi slt, %60, %c16_i32_31 : i32
        %63 = arith.andi %61, %62 : i1
        %cst_32 = arith.constant 1.000000e+00 : f32
        %cst_33 = arith.constant 0.000000e+00 : f32
        %64 = arith.select %63, %cst_32, %cst_33 : f32
        %c0_i32_34 = arith.constant 0 : i32
        %c15_i32_35 = arith.constant 15 : i32
        %65 = arith.maxsi %c0_i32_34, %60 : i32
        %66 = arith.minsi %c15_i32_35, %65 : i32
        %c0_36 = arith.constant 0 : index
        %67 = arith.index_cast %66 : i32 to index
        %c0_37 = arith.constant 0 : index
        %c0_38 = arith.constant 0 : index
        %68 = vector.load %arg3[%c0_36, %67, %c0_37, %c0_38] : memref<1x16x18x288xbf16, #tpu.memory_space<vmem>>, vector<1x1x18x288xbf16>
        %69 = vector.shape_cast %68 : vector<1x1x18x288xbf16> to vector<18x288xbf16>
        %70 = arith.extf %69 : vector<18x288xbf16> to vector<18x288xf32>
        %71 = vector.extract_strided_slice %11 {offsets = [1, 0, 0], sizes = [1, 3, 288], strides = [1, 1, 1]} : vector<3x3x288xf32> to vector<1x3x288xf32>
        %72 = vector.shape_cast %71 : vector<1x3x288xf32> to vector<3x288xf32>
        %73 = vector.broadcast %64 : f32 to vector<3x288xf32>
        %74 = arith.mulf %72, %73 : vector<3x288xf32>
        %75 = vector.extract_strided_slice %70 {offsets = [0, 0], sizes = [16, 288], strides = [1, 1]} : vector<18x288xf32> to vector<16x288xf32>
        %76 = vector.extract_strided_slice %74 {offsets = [0, 0], sizes = [1, 288], strides = [1, 1]} : vector<3x288xf32> to vector<1x288xf32>
        %77 = vector.broadcast %76 : vector<1x288xf32> to vector<16x288xf32>
        %78 = arith.mulf %75, %77 : vector<16x288xf32>
        %79 = arith.addf %59, %78 : vector<16x288xf32>
        %80 = vector.extract_strided_slice %70 {offsets = [1, 0], sizes = [16, 288], strides = [1, 1]} : vector<18x288xf32> to vector<16x288xf32>
        %81 = vector.extract_strided_slice %74 {offsets = [1, 0], sizes = [1, 288], strides = [1, 1]} : vector<3x288xf32> to vector<1x288xf32>
        %82 = vector.broadcast %81 : vector<1x288xf32> to vector<16x288xf32>
        %83 = arith.mulf %80, %82 : vector<16x288xf32>
        %84 = arith.addf %79, %83 : vector<16x288xf32>
        %85 = vector.extract_strided_slice %70 {offsets = [2, 0], sizes = [16, 288], strides = [1, 1]} : vector<18x288xf32> to vector<16x288xf32>
        %86 = vector.extract_strided_slice %74 {offsets = [2, 0], sizes = [1, 288], strides = [1, 1]} : vector<3x288xf32> to vector<1x288xf32>
        %87 = vector.broadcast %86 : vector<1x288xf32> to vector<16x288xf32>
        %88 = arith.mulf %85, %87 : vector<16x288xf32>
        %89 = arith.addf %84, %88 : vector<16x288xf32>
        %c1_i32_39 = arith.constant 1 : i32
        %90 = arith.addi %28, %c1_i32_39 : i32
        %c0_i32_40 = arith.constant 0 : i32
        %91 = arith.cmpi sge, %90, %c0_i32_40 : i32
        %c16_i32_41 = arith.constant 16 : i32
        %92 = arith.cmpi slt, %90, %c16_i32_41 : i32
        %93 = arith.andi %91, %92 : i1
        %cst_42 = arith.constant 1.000000e+00 : f32
        %cst_43 = arith.constant 0.000000e+00 : f32
        %94 = arith.select %93, %cst_42, %cst_43 : f32
        %c0_i32_44 = arith.constant 0 : i32
        %c15_i32_45 = arith.constant 15 : i32
        %95 = arith.maxsi %c0_i32_44, %90 : i32
        %96 = arith.minsi %c15_i32_45, %95 : i32
        %c0_46 = arith.constant 0 : index
        %97 = arith.index_cast %96 : i32 to index
        %c0_47 = arith.constant 0 : index
        %c0_48 = arith.constant 0 : index
        %98 = vector.load %arg3[%c0_46, %97, %c0_47, %c0_48] : memref<1x16x18x288xbf16, #tpu.memory_space<vmem>>, vector<1x1x18x288xbf16>
        %99 = vector.shape_cast %98 : vector<1x1x18x288xbf16> to vector<18x288xbf16>
        %100 = arith.extf %99 : vector<18x288xbf16> to vector<18x288xf32>
        %101 = vector.extract_strided_slice %11 {offsets = [2, 0, 0], sizes = [1, 3, 288], strides = [1, 1, 1]} : vector<3x3x288xf32> to vector<1x3x288xf32>
        %102 = vector.shape_cast %101 : vector<1x3x288xf32> to vector<3x288xf32>
        %103 = vector.broadcast %94 : f32 to vector<3x288xf32>
        %104 = arith.mulf %102, %103 : vector<3x288xf32>
        %105 = vector.extract_strided_slice %100 {offsets = [0, 0], sizes = [16, 288], strides = [1, 1]} : vector<18x288xf32> to vector<16x288xf32>
        %106 = vector.extract_strided_slice %104 {offsets = [0, 0], sizes = [1, 288], strides = [1, 1]} : vector<3x288xf32> to vector<1x288xf32>
        %107 = vector.broadcast %106 : vector<1x288xf32> to vector<16x288xf32>
        %108 = arith.mulf %105, %107 : vector<16x288xf32>
        %109 = arith.addf %89, %108 : vector<16x288xf32>
        %110 = vector.extract_strided_slice %100 {offsets = [1, 0], sizes = [16, 288], strides = [1, 1]} : vector<18x288xf32> to vector<16x288xf32>
        %111 = vector.extract_strided_slice %104 {offsets = [1, 0], sizes = [1, 288], strides = [1, 1]} : vector<3x288xf32> to vector<1x288xf32>
        %112 = vector.broadcast %111 : vector<1x288xf32> to vector<16x288xf32>
        %113 = arith.mulf %110, %112 : vector<16x288xf32>
        %114 = arith.addf %109, %113 : vector<16x288xf32>
        %115 = vector.extract_strided_slice %100 {offsets = [2, 0], sizes = [16, 288], strides = [1, 1]} : vector<18x288xf32> to vector<16x288xf32>
        %116 = vector.extract_strided_slice %104 {offsets = [2, 0], sizes = [1, 288], strides = [1, 1]} : vector<3x288xf32> to vector<1x288xf32>
        %117 = vector.broadcast %116 : vector<1x288xf32> to vector<16x288xf32>
        %118 = arith.mulf %115, %117 : vector<16x288xf32>
        %119 = arith.addf %114, %118 : vector<16x288xf32>
        %cst_49 = arith.constant dense<0.000000e+00> : vector<288xf32>
        %120 = vector.multi_reduction <add>, %119, %cst_49 [0] : vector<16x288xf32> to vector<288xf32>
        %121 = vector.shape_cast %120 : vector<288xf32> to vector<1x288xf32>
        %122 = arith.addf %arg10, %121 : vector<1x288xf32>
        %123 = arith.mulf %119, %119 : vector<16x288xf32>
        %cst_50 = arith.constant dense<0.000000e+00> : vector<288xf32>
        %124 = vector.multi_reduction <add>, %123, %cst_50 [0] : vector<16x288xf32> to vector<288xf32>
        %125 = vector.shape_cast %124 : vector<288xf32> to vector<1x288xf32>
        %126 = arith.addf %arg11, %125 : vector<1x288xf32>
        scf.yield %122, %126 : vector<1x288xf32>, vector<1x288xf32>
      }
      %c8_i32_13 = arith.constant 8 : i32
      %c0_14 = arith.constant 0 : index
      %c0_15 = arith.constant 0 : index
      %22 = vector.load %arg7[%c0_14, %c0_15] : memref<2x288xf32, #tpu.memory_space<vmem>>, vector<1x288xf32>
      %23 = arith.addf %22, %21#0 : vector<1x288xf32>
      %c0_16 = arith.constant 0 : index
      %c0_17 = arith.constant 0 : index
      %24 = vector.load %arg7[%c0_16, %c0_17] : memref<2x288xf32, #tpu.memory_space<vmem>>, vector<1x288xf32>
      tpu.vector_store %arg7[%c0_16, %c0_17], %23 {strides = array<i32>} : memref<2x288xf32, #tpu.memory_space<vmem>>, vector<1x288xf32>,
      %c1 = arith.constant 1 : index
      %c0_18 = arith.constant 0 : index
      %25 = vector.load %arg7[%c1, %c0_18] : memref<2x288xf32, #tpu.memory_space<vmem>>, vector<1x288xf32>
      %26 = arith.addf %25, %21#1 : vector<1x288xf32>
      %c1_19 = arith.constant 1 : index
      %c0_20 = arith.constant 0 : index
      %27 = vector.load %arg7[%c1_19, %c0_20] : memref<2x288xf32, #tpu.memory_space<vmem>>, vector<1x288xf32>
      tpu.vector_store %arg7[%c1_19, %c0_20], %26 {strides = array<i32>} : memref<2x288xf32, #tpu.memory_space<vmem>>, vector<1x288xf32>,
    } else {
    }
    %c1_i32_8 = arith.constant 1 : i32
    %16 = arith.cmpi eq, %arg0, %c1_i32_8 : i32
    %17 = arith.extui %16 : i1 to i32
    %c0_i32_9 = arith.constant 0 : i32
    %18 = arith.cmpi ne, %17, %c0_i32_9 : i32
    scf.if %18 {
      %c0_10 = arith.constant 0 : index
      %c0_11 = arith.constant 0 : index
      %19 = vector.load %arg8[%c0_10, %c0_11] : memref<2x288xf32, #tpu.memory_space<vmem>>, vector<1x288xf32>
      %c1 = arith.constant 1 : index
      %c0_12 = arith.constant 0 : index
      %20 = vector.load %arg8[%c1, %c0_12] : memref<2x288xf32, #tpu.memory_space<vmem>>, vector<1x288xf32>
      %c0_i32_13 = arith.constant 0 : i32
      %c8_i32_14 = arith.constant 8 : i32
      %21 = arith.addi %c0_i32_13, %c8_i32_14 : i32
      %c1_i32_15 = arith.constant 1 : i32
      scf.for %arg9 = %c0_i32_13 to %21 step %c1_i32_15  : i32 {
        %22 = arith.addi %12, %arg9 : i32
        %cst = arith.constant 0.000000e+00 : f32
        %23 = vector.broadcast %cst : f32 to vector<16x288xf32>
        %c-1_i32 = arith.constant -1 : i32
        %24 = arith.addi %22, %c-1_i32 : i32
        %c0_i32_17 = arith.constant 0 : i32
        %25 = arith.cmpi sge, %24, %c0_i32_17 : i32
        %c16_i32 = arith.constant 16 : i32
        %26 = arith.cmpi slt, %24, %c16_i32 : i32
        %27 = arith.andi %25, %26 : i1
        %cst_18 = arith.constant 1.000000e+00 : f32
        %cst_19 = arith.constant 0.000000e+00 : f32
        %28 = arith.select %27, %cst_18, %cst_19 : f32
        %c0_i32_20 = arith.constant 0 : i32
        %c15_i32 = arith.constant 15 : i32
        %29 = arith.maxsi %c0_i32_20, %24 : i32
        %30 = arith.minsi %c15_i32, %29 : i32
        %c0_21 = arith.constant 0 : index
        %31 = arith.index_cast %30 : i32 to index
        %c0_22 = arith.constant 0 : index
        %c0_23 = arith.constant 0 : index
        %32 = vector.load %arg3[%c0_21, %31, %c0_22, %c0_23] : memref<1x16x18x288xbf16, #tpu.memory_space<vmem>>, vector<1x1x18x288xbf16>
        %33 = vector.shape_cast %32 : vector<1x1x18x288xbf16> to vector<18x288xbf16>
        %34 = arith.extf %33 : vector<18x288xbf16> to vector<18x288xf32>
        %35 = vector.extract_strided_slice %11 {offsets = [0, 0, 0], sizes = [1, 3, 288], strides = [1, 1, 1]} : vector<3x3x288xf32> to vector<1x3x288xf32>
        %36 = vector.shape_cast %35 : vector<1x3x288xf32> to vector<3x288xf32>
        %37 = vector.broadcast %28 : f32 to vector<3x288xf32>
        %38 = arith.mulf %36, %37 : vector<3x288xf32>
        %39 = vector.extract_strided_slice %34 {offsets = [0, 0], sizes = [16, 288], strides = [1, 1]} : vector<18x288xf32> to vector<16x288xf32>
        %40 = vector.extract_strided_slice %38 {offsets = [0, 0], sizes = [1, 288], strides = [1, 1]} : vector<3x288xf32> to vector<1x288xf32>
        %41 = vector.broadcast %40 : vector<1x288xf32> to vector<16x288xf32>
        %42 = arith.mulf %39, %41 : vector<16x288xf32>
        %43 = arith.addf %23, %42 : vector<16x288xf32>
        %44 = vector.extract_strided_slice %34 {offsets = [1, 0], sizes = [16, 288], strides = [1, 1]} : vector<18x288xf32> to vector<16x288xf32>
        %45 = vector.extract_strided_slice %38 {offsets = [1, 0], sizes = [1, 288], strides = [1, 1]} : vector<3x288xf32> to vector<1x288xf32>
        %46 = vector.broadcast %45 : vector<1x288xf32> to vector<16x288xf32>
        %47 = arith.mulf %44, %46 : vector<16x288xf32>
        %48 = arith.addf %43, %47 : vector<16x288xf32>
        %49 = vector.extract_strided_slice %34 {offsets = [2, 0], sizes = [16, 288], strides = [1, 1]} : vector<18x288xf32> to vector<16x288xf32>
        %50 = vector.extract_strided_slice %38 {offsets = [2, 0], sizes = [1, 288], strides = [1, 1]} : vector<3x288xf32> to vector<1x288xf32>
        %51 = vector.broadcast %50 : vector<1x288xf32> to vector<16x288xf32>
        %52 = arith.mulf %49, %51 : vector<16x288xf32>
        %53 = arith.addf %48, %52 : vector<16x288xf32>
        %c0_i32_24 = arith.constant 0 : i32
        %54 = arith.addi %22, %c0_i32_24 : i32
        %c0_i32_25 = arith.constant 0 : i32
        %55 = arith.cmpi sge, %54, %c0_i32_25 : i32
        %c16_i32_26 = arith.constant 16 : i32
        %56 = arith.cmpi slt, %54, %c16_i32_26 : i32
        %57 = arith.andi %55, %56 : i1
        %cst_27 = arith.constant 1.000000e+00 : f32
        %cst_28 = arith.constant 0.000000e+00 : f32
        %58 = arith.select %57, %cst_27, %cst_28 : f32
        %c0_i32_29 = arith.constant 0 : i32
        %c15_i32_30 = arith.constant 15 : i32
        %59 = arith.maxsi %c0_i32_29, %54 : i32
        %60 = arith.minsi %c15_i32_30, %59 : i32
        %c0_31 = arith.constant 0 : index
        %61 = arith.index_cast %60 : i32 to index
        %c0_32 = arith.constant 0 : index
        %c0_33 = arith.constant 0 : index
        %62 = vector.load %arg3[%c0_31, %61, %c0_32, %c0_33] : memref<1x16x18x288xbf16, #tpu.memory_space<vmem>>, vector<1x1x18x288xbf16>
        %63 = vector.shape_cast %62 : vector<1x1x18x288xbf16> to vector<18x288xbf16>
        %64 = arith.extf %63 : vector<18x288xbf16> to vector<18x288xf32>
        %65 = vector.extract_strided_slice %11 {offsets = [1, 0, 0], sizes = [1, 3, 288], strides = [1, 1, 1]} : vector<3x3x288xf32> to vector<1x3x288xf32>
        %66 = vector.shape_cast %65 : vector<1x3x288xf32> to vector<3x288xf32>
        %67 = vector.broadcast %58 : f32 to vector<3x288xf32>
        %68 = arith.mulf %66, %67 : vector<3x288xf32>
        %69 = vector.extract_strided_slice %64 {offsets = [0, 0], sizes = [16, 288], strides = [1, 1]} : vector<18x288xf32> to vector<16x288xf32>
        %70 = vector.extract_strided_slice %68 {offsets = [0, 0], sizes = [1, 288], strides = [1, 1]} : vector<3x288xf32> to vector<1x288xf32>
        %71 = vector.broadcast %70 : vector<1x288xf32> to vector<16x288xf32>
        %72 = arith.mulf %69, %71 : vector<16x288xf32>
        %73 = arith.addf %53, %72 : vector<16x288xf32>
        %74 = vector.extract_strided_slice %64 {offsets = [1, 0], sizes = [16, 288], strides = [1, 1]} : vector<18x288xf32> to vector<16x288xf32>
        %75 = vector.extract_strided_slice %68 {offsets = [1, 0], sizes = [1, 288], strides = [1, 1]} : vector<3x288xf32> to vector<1x288xf32>
        %76 = vector.broadcast %75 : vector<1x288xf32> to vector<16x288xf32>
        %77 = arith.mulf %74, %76 : vector<16x288xf32>
        %78 = arith.addf %73, %77 : vector<16x288xf32>
        %79 = vector.extract_strided_slice %64 {offsets = [2, 0], sizes = [16, 288], strides = [1, 1]} : vector<18x288xf32> to vector<16x288xf32>
        %80 = vector.extract_strided_slice %68 {offsets = [2, 0], sizes = [1, 288], strides = [1, 1]} : vector<3x288xf32> to vector<1x288xf32>
        %81 = vector.broadcast %80 : vector<1x288xf32> to vector<16x288xf32>
        %82 = arith.mulf %79, %81 : vector<16x288xf32>
        %83 = arith.addf %78, %82 : vector<16x288xf32>
        %c1_i32_34 = arith.constant 1 : i32
        %84 = arith.addi %22, %c1_i32_34 : i32
        %c0_i32_35 = arith.constant 0 : i32
        %85 = arith.cmpi sge, %84, %c0_i32_35 : i32
        %c16_i32_36 = arith.constant 16 : i32
        %86 = arith.cmpi slt, %84, %c16_i32_36 : i32
        %87 = arith.andi %85, %86 : i1
        %cst_37 = arith.constant 1.000000e+00 : f32
        %cst_38 = arith.constant 0.000000e+00 : f32
        %88 = arith.select %87, %cst_37, %cst_38 : f32
        %c0_i32_39 = arith.constant 0 : i32
        %c15_i32_40 = arith.constant 15 : i32
        %89 = arith.maxsi %c0_i32_39, %84 : i32
        %90 = arith.minsi %c15_i32_40, %89 : i32
        %c0_41 = arith.constant 0 : index
        %91 = arith.index_cast %90 : i32 to index
        %c0_42 = arith.constant 0 : index
        %c0_43 = arith.constant 0 : index
        %92 = vector.load %arg3[%c0_41, %91, %c0_42, %c0_43] : memref<1x16x18x288xbf16, #tpu.memory_space<vmem>>, vector<1x1x18x288xbf16>
        %93 = vector.shape_cast %92 : vector<1x1x18x288xbf16> to vector<18x288xbf16>
        %94 = arith.extf %93 : vector<18x288xbf16> to vector<18x288xf32>
        %95 = vector.extract_strided_slice %11 {offsets = [2, 0, 0], sizes = [1, 3, 288], strides = [1, 1, 1]} : vector<3x3x288xf32> to vector<1x3x288xf32>
        %96 = vector.shape_cast %95 : vector<1x3x288xf32> to vector<3x288xf32>
        %97 = vector.broadcast %88 : f32 to vector<3x288xf32>
        %98 = arith.mulf %96, %97 : vector<3x288xf32>
        %99 = vector.extract_strided_slice %94 {offsets = [0, 0], sizes = [16, 288], strides = [1, 1]} : vector<18x288xf32> to vector<16x288xf32>
        %100 = vector.extract_strided_slice %98 {offsets = [0, 0], sizes = [1, 288], strides = [1, 1]} : vector<3x288xf32> to vector<1x288xf32>
        %101 = vector.broadcast %100 : vector<1x288xf32> to vector<16x288xf32>
        %102 = arith.mulf %99, %101 : vector<16x288xf32>
        %103 = arith.addf %83, %102 : vector<16x288xf32>
        %104 = vector.extract_strided_slice %94 {offsets = [1, 0], sizes = [16, 288], strides = [1, 1]} : vector<18x288xf32> to vector<16x288xf32>
        %105 = vector.extract_strided_slice %98 {offsets = [1, 0], sizes = [1, 288], strides = [1, 1]} : vector<3x288xf32> to vector<1x288xf32>
        %106 = vector.broadcast %105 : vector<1x288xf32> to vector<16x288xf32>
        %107 = arith.mulf %104, %106 : vector<16x288xf32>
        %108 = arith.addf %103, %107 : vector<16x288xf32>
        %109 = vector.extract_strided_slice %94 {offsets = [2, 0], sizes = [16, 288], strides = [1, 1]} : vector<18x288xf32> to vector<16x288xf32>
        %110 = vector.extract_strided_slice %98 {offsets = [2, 0], sizes = [1, 288], strides = [1, 1]} : vector<3x288xf32> to vector<1x288xf32>
        %111 = vector.broadcast %110 : vector<1x288xf32> to vector<16x288xf32>
        %112 = arith.mulf %109, %111 : vector<16x288xf32>
        %113 = arith.addf %108, %112 : vector<16x288xf32>
        %114 = vector.broadcast %19 : vector<1x288xf32> to vector<16x288xf32>
        %115 = arith.mulf %113, %114 : vector<16x288xf32>
        %116 = vector.broadcast %20 : vector<1x288xf32> to vector<16x288xf32>
        %117 = arith.addf %115, %116 : vector<16x288xf32>
        %c0_44 = arith.constant 0 : index
        %118 = arith.index_cast %arg9 : i32 to index
        %c0_45 = arith.constant 0 : index
        %c0_46 = arith.constant 0 : index
        %119 = vector.load %arg6[%c0_44, %118, %c0_45, %c0_46] : memref<1x8x16x288xf32, #tpu.memory_space<vmem>>, vector<1x1x16x288xf32>
        %120 = vector.shape_cast %119 : vector<1x1x16x288xf32> to vector<16x288xf32>
        %121 = vector.shape_cast %117 : vector<16x288xf32> to vector<1x1x16x288xf32>
        tpu.vector_store %arg6[%c0_44, %118, %c0_45, %c0_46], %121 {strides = array<i32>} : memref<1x8x16x288xf32, #tpu.memory_space<vmem>>, vector<1x1x16x288xf32>,
      }
      %c8_i32_16 = arith.constant 8 : i32
    } else {
    }
    return
  }
  func.func @transform_0(%arg0: i32, %arg1: i32, %arg2: i32) -> (i32, i32, i32, i32) {
    %c0_i32 = arith.constant 0 : i32
    %c0_i32_0 = arith.constant 0 : i32
    %c0_i32_1 = arith.constant 0 : i32
    %c0_i32_2 = arith.constant 0 : i32
    return %arg1, %c0_i32, %c0_i32_0, %c0_i32_1 : i32, i32, i32, i32
  }
  func.func @transform_1(%arg0: i32, %arg1: i32, %arg2: i32) -> (i32, i32, i32) {
    %c0_i32 = arith.constant 0 : i32
    %c0_i32_0 = arith.constant 0 : i32
    %c0_i32_1 = arith.constant 0 : i32
    %c0_i32_2 = arith.constant 0 : i32
    return %c0_i32, %c0_i32_0, %c0_i32_1 : i32, i32, i32
  }
  func.func @transform_2(%arg0: i32, %arg1: i32, %arg2: i32) -> (i32, i32) {
    %c0_i32 = arith.constant 0 : i32
    %c0_i32_0 = arith.constant 0 : i32
    %c0_i32_1 = arith.constant 0 : i32
    return %c0_i32, %c0_i32_0 : i32, i32
  }
  func.func @transform_3(%arg0: i32, %arg1: i32, %arg2: i32) -> (i32, i32, i32, i32) {
    %0 = arith.muli %arg0, %arg1 : i32
    %1 = arith.muli %arg0, %arg2 : i32
    %c0_i32 = arith.constant 0 : i32
    %c0_i32_0 = arith.constant 0 : i32
    %c0_i32_1 = arith.constant 0 : i32
    return %0, %1, %c0_i32, %c0_i32_0 : i32, i32, i32, i32
  }
}

</mosaic_0001>

<llo_original>
// kernel: depthwise_conv_bn.1
$region0: #{depthwise_conv_bn.1}
  #allocation0 [shape = 'u32[]', space=smem, size = 0x4, offset = 0x4, fixed_abs, tag = 'smem constant byte address 0x4 - core index']
  #allocation1 [shape = 'u32[144,128]{1,0:T(1,128)}', space=vmem, size = 0x12000, scoped, tag = 'internal scratch']
  #allocation2 [shape = 'f32[2,288]{1,0:T(2,128)}', space=vmem, size = 0xc00, scoped, tag = 'scratch operand']
  #allocation3 [shape = 'f32[2,288]{1,0:T(2,128)}', space=vmem, size = 0xc00, scoped, tag = 'scratch operand']
  %s0 = inlined_call_operand.vmem [shape: bf16[2,16,18,288], index: 0, kind: input, shape index: {}]
  %s1 = inlined_call_operand.vmem [shape: f32[3,3,288], index: 1, kind: input, shape index: {}]
  %s2 = inlined_call_operand.vmem [shape: f32[2,288], index: 2, kind: input, shape index: {}]
  %s3 = inlined_call_operand.hbm [shape: f32[2,16,16,288], index: 3, kind: output, shape index: {}]
  %s4 = sld [smem:[#allocation0]]
  $region75: #{depthwise_conv_bn.1} parent=0
    _
  %s6 = ssub.s32 1, %s4
  %s7 = scalar_select 0, %s6, %s4
  $region1: #{depthwise_conv_bn.1} parent=0
    #allocation4 [shape = 'u8[393216]{0}', space=vmem, size = 0x60000, scoped, tag = 'output window, operand 0']
    #allocation5 [shape = 's32[2]{0}', space=sflag, size = 0x8, scoped, tag = 'scoped memory for depthwise_conv_bn.1']
    %8 = vsyncpa [#allocation5], 0
    %s9 = scalar_lea.sflag [#allocation5], 1
    %10 = vsyncpa %s9, 0
    loop: start=0, step=1, limit=10
    $region2: #{depthwise_conv_bn.1} parent=1 // loop_pre_header
      _
    $region3: #{depthwise_conv_bn.1} parent=1 // loop_header
      %s12 = sphi 0, %s16
      %p13 = scmp.ge.s32.totalorder %s12, 10
      %s19 = sphi 0, %s38
      %s20 = sphi 0, %s34
      %s21 = sphi 0, %s30
      %s22 = sphi 0, %s19
      %s23 = sphi 0, %s20
      %s24 = sphi 0, %s21
      %s25 = sphi 0, %s22
      %s26 = sphi 0, %s23
      %s27 = sphi 0, %s24
      %s41 = sphi 0, %s43
      %s44 = sphi 0, %s41
      %s45 = sphi 0, %s44
      %s61 = sphi 0, %s45
      %s65 = sphi 0, %s65
      %s67 = sphi 0, %s65
      %s68 = sphi 0, %s67
      %s82 = sphi 0, %s68
      %s86 = sphi 0, %s86
      %s88 = sphi 0, %s86
      %s89 = sphi 0, %s88
      %s103 = sphi 0, %s89
      %s115 = sphi 0, %s117
      %s118 = sphi 0, %s115
      %s119 = sphi 0, %s118
      %s135 = sphi 0, %s119
    $region4: #{depthwise_conv_bn.1} parent=1 // loop_header_branch
      %15 = sbr.rel (%p13) target = $region8
    $region5: #{depthwise_conv_bn.1} parent=1 // loop_body
      %s17 = ssub.s32 %s12, 1
      %s18 = ssub.s32 %s12, 2
      %s28 = sadd.s32 1, %s21
      %p29 = scmp.ge.s32.totalorder %s28, 2
      %s30 = scalar_select %p29, 0, %s28
      %s31 = sadd.s32 1, %s20
      %s32 = scalar_select %p29, %s31, %s20
      %p33 = scmp.ge.s32.totalorder %s32, 2
      %s34 = scalar_select %p33, 0, %s32
      %s35 = sadd.s32 1, %s19
      %s36 = scalar_select %p33, %s35, %s19
      %p37 = scmp.ge.s32.totalorder %s36, 2
      %s38 = scalar_select %p37, 0, %s36
      %s39 = ssub.s32 %s20, %s34
      %p40 = scmp.eq.s32.totalorder %s39, 0
      %s42 = sadd.s32 %s41, 1
      %s43 = scalar_select %p40, %s41, %s42
      %p46 = pneg %p40
      %p47 = scmp.eq.s32.totalorder %s12, 7
      %p48 = por %p46, %p47
      %p49 = scmp.ne.s32.totalorder %s41, %s44
      %p50 = scmp.eq.s32.totalorder %s12, 0
      %p51 = por %p49, %p50
      %p52 = scmp.ne.s32.totalorder %s41, %s44
      %p53 = scmp.eq.s32.totalorder %s17, 7
      %p54 = por %p52, %p53
      %p55 = scmp.ne.s32.totalorder %s44, %s45
      %p56 = scmp.eq.s32.totalorder %s17, 0
      %p57 = por %p55, %p56
      %p58 = scmp.ne.s32.totalorder %s44, %s45
      %p59 = scmp.eq.s32.totalorder %s18, 7
      %p60 = por %p58, %p59
      %p62 = scmp.ne.s32.totalorder %s45, %s61
      %p63 = scmp.eq.s32.totalorder %s18, 0
      %p64 = por %p62, %p63
      %s66 = sadd.s32 %s65, 1
      %p69 = scmp.eq.s32.totalorder %s12, 7
      %p70 = scmp.ne.s32.totalorder %s65, %s67
      %p71 = scmp.eq.s32.totalorder %s12, 0
      %p72 = por %p70, %p71
      %p73 = scmp.ne.s32.totalorder %s65, %s67
      %p74 = scmp.eq.s32.totalorder %s17, 7
      %p75 = por %p73, %p74
      %p76 = scmp.ne.s32.totalorder %s67, %s68
      %p77 = scmp.eq.s32.totalorder %s17, 0
      %p78 = por %p76, %p77
      %p79 = scmp.ne.s32.totalorder %s67, %s68
      %p80 = scmp.eq.s32.totalorder %s18, 7
      %p81 = por %p79, %p80
      %p83 = scmp.ne.s32.totalorder %s68, %s82
      %p84 = scmp.eq.s32.totalorder %s18, 0
      %p85 = por %p83, %p84
      %s87 = sadd.s32 %s86, 1
      %p90 = scmp.eq.s32.totalorder %s12, 7
      %p91 = scmp.ne.s32.totalorder %s86, %s88
      %p92 = scmp.eq.s32.totalorder %s12, 0
      %p93 = por %p91, %p92
      %p94 = scmp.ne.s32.totalorder %s86, %s88
      %p95 = scmp.eq.s32.totalorder %s17, 7
      %p96 = por %p94, %p95
      %p97 = scmp.ne.s32.totalorder %s88, %s89
      %p98 = scmp.eq.s32.totalorder %s17, 0
      %p99 = por %p97, %p98
      %p100 = scmp.ne.s32.totalorder %s88, %s89
      %p101 = scmp.eq.s32.totalorder %s18, 7
      %p102 = por %p100, %p101
      %p104 = scmp.ne.s32.totalorder %s89, %s103
      %p105 = scmp.eq.s32.totalorder %s18, 0
      %p106 = por %p104, %p105
      %s107 = smul.u32 %s19, %s20
      %s108 = smul.u32 %s19, %s21
      %s109 = smul.u32 %s38, %s34
      %s110 = smul.u32 %s38, %s30
      %s111 = ssub.s32 %s107, %s109
      %s112 = ssub.s32 %s108, %s110
      %s113 = sor.u32 %s111, %s112
      %p114 = scmp.eq.s32.totalorder %s113, 0
      %s116 = sadd.s32 %s115, 1
      %s117 = scalar_select %p114, %s115, %s116
      %p120 = pneg %p114
      %p121 = scmp.eq.s32.totalorder %s12, 7
      %p122 = por %p120, %p121
      %p123 = scmp.ne.s32.totalorder %s115, %s118
      %p124 = scmp.eq.s32.totalorder %s12, 0
      %p125 = por %p123, %p124
      %p126 = scmp.ne.s32.totalorder %s115, %s118
      %p127 = scmp.eq.s32.totalorder %s17, 7
      %p128 = por %p126, %p127
      %p129 = scmp.ne.s32.totalorder %s118, %s119
      %p130 = scmp.eq.s32.totalorder %s17, 0
      %p131 = por %p129, %p130
      %p132 = scmp.ne.s32.totalorder %s118, %s119
      %p133 = scmp.eq.s32.totalorder %s18, 7
      %p134 = por %p132, %p133
      %p136 = scmp.ne.s32.totalorder %s119, %s135
      %p137 = scmp.eq.s32.totalorder %s18, 0
      %p138 = por %p136, %p137
      %p139 = scmp.le.s32.totalorder 1, %s12
      %p140 = scmp.lt.s32.totalorder %s12, 9
      %p141 = pnand %p139, %p140
      %p142 = pneg %p141
      // Predicated region
      $region9: #{depthwise_conv_bn.1} parent=5 // pred_check
        _
      $region10: #{depthwise_conv_bn.1} parent=5 // pred_check_branch
        %144 = sbr.rel (%p141) target = $region12
      $region11: #{depthwise_conv_bn.1} parent=5 // pred_region
        %s145 = ssub.s32 %s12, 1
        // Predicated region
        $region13: #{depthwise_conv_bn.1} parent=11 // pred_check
          %p146 = pneg %p78
        $region14: #{depthwise_conv_bn.1} parent=11 // pred_check_branch
          %148 = sbr.rel (%p146) target = $region16
        $region15: #{depthwise_conv_bn.1} parent=11 // pred_region
          _
        $region16: #{depthwise_conv_bn.1} parent=11 // pred_fallthru
          _
        // Predicated region
        $region17: #{depthwise_conv_bn.1} parent=11 // pred_check
          %p149 = pneg %p99
        $region18: #{depthwise_conv_bn.1} parent=11 // pred_check_branch
          %151 = sbr.rel (%p149) target = $region20
        $region19: #{depthwise_conv_bn.1} parent=11 // pred_region
          _
        $region20: #{depthwise_conv_bn.1} parent=11 // pred_fallthru
          _
      $region12: #{depthwise_conv_bn.1} parent=5 // pred_fallthru
        _
      %p152 = scmp.lt.s32.totalorder %s12, 8
      // Predicated region
      $region21: #{depthwise_conv_bn.1} parent=5 // pred_check
        %p153 = pneg %p152
      $region22: #{depthwise_conv_bn.1} parent=5 // pred_check_branch
        %155 = sbr.rel (%p153) target = $region24
      $region23: #{depthwise_conv_bn.1} parent=5 // pred_region
        // Predicated region
        $region25: #{depthwise_conv_bn.1} parent=23 // pred_check
          %p156 = pneg %p51
        $region26: #{depthwise_conv_bn.1} parent=23 // pred_check_branch
          %158 = sbr.rel (%p156) target = $region28
        $region27: #{depthwise_conv_bn.1} parent=23 // pred_region
          %p159 = scmp.lt.s32.totalorder %s20, 1
          %s160 = scalar_select %p159, %s20, 1
          %s161 = smul.addr %s160, 144
          %s162 = smul.addr %s161, 4
          %s163 = scalar_lea.vmem %s0, %s162
        $region28: #{depthwise_conv_bn.1} parent=23 // pred_fallthru
          _
      $region24: #{depthwise_conv_bn.1} parent=5 // pred_fallthru
        _
      %p164 = scmp.le.s32.totalorder 1, %s12
      %p165 = scmp.lt.s32.totalorder %s12, 9
      %p166 = pnand %p164, %p165
      %p167 = pneg %p166
      // Predicated region
      $region29: #{depthwise_conv_bn.1} parent=5 // pred_check
        _
      $region30: #{depthwise_conv_bn.1} parent=5 // pred_check_branch
        %169 = sbr.rel (%p166) target = $region32
      $region31: #{depthwise_conv_bn.1} parent=5 // pred_region
        %s170 = ssub.s32 %s12, 1
        %p171 = scmp.lt.s32.totalorder %s23, 1
        %s172 = scalar_select %p171, %s23, 1
        %s173 = smul.addr %s172, 144
        %s174 = smul.addr %s173, 4
        %s175 = scalar_lea.vmem %s0, %s174
        %p176 = pneg %p57
        %p177 = pneg %p54
        %p178 = pneg %p78
        %p179 = pneg %p75
        %p180 = pneg %p99
        %p181 = pneg %p96
        %p182 = pneg %p131
        %p183 = pneg %p128
        %s184 = sand.u32 %s118, 1
        %s185 = scalar_lea.sflag [#allocation5], %s184
        %s186 = sand.u32 %s118, 1
        %s187 = smul.addr %s186, 384
        %s188 = scalar_lea.vmem [#allocation4], %s187
        %p189 = scmp.lt.s32.totalorder %s23, 1
        %s190 = scalar_select %p189, %s23, 1
        %s191 = smul.addr %s190, 144
        %s192 = smul.addr %s191, 4
        %s193 = scalar_lea.vmem %s0, %s192
        %s194 = smul.u32 %s22, %s23
        %s195 = smul.u32 %s22, %s24
        %s196 = smul.u32 8, %s195
        %p197 = scmp.eq.s32.totalorder %s23, 0
        %p198 = scmp.eq.s32.totalorder %s24, 0
        %p199 = pnand %p197, %p198
        %p200 = pneg %p199
        %p201 = scmp.eq.s32.totalorder %s22, 0
        %p202 = pnand %p201, %p200
        %p203 = pneg %p202
        // Predicated region
        $region33: #{depthwise_conv_bn.1} parent=31 // pred_check
          _
        $region34: #{depthwise_conv_bn.1} parent=31 // pred_check_branch
          %205 = sbr.rel (%p202) target = $region36
        $region35: #{depthwise_conv_bn.1} parent=31 // pred_region
          %vm206 = vcmask 1041408
          %vm207 = vcmask 1043458
          %vm208 = vmor %vm207, %vm206
          %vm209 = vcmask 259076
          %vm210 = vmor %vm209, %vm208
          %211 = vst.msk [vmem:[#allocation2] sm:$0x3f] %vm210, 0.0
        $region36: #{depthwise_conv_bn.1} parent=31 // pred_fallthru
          _
        %p212 = scmp.eq.s32.totalorder %s22, 1
        %p213 = pnand %p212, %p200
        %p214 = pneg %p213
        // Predicated region
        $region37: #{depthwise_conv_bn.1} parent=31 // pred_check
          _
        $region38: #{depthwise_conv_bn.1} parent=31 // pred_check_branch
          %216 = sbr.rel (%p213) target = $region40
        $region39: #{depthwise_conv_bn.1} parent=31 // pred_region
          %v217 = vld [vmem:[#allocation2] ss:$2 sm:$0x7]
          %v218 = vmul.f32 %v217, 0.001953125
          %s219 = scalar_lea.vmem [#allocation2], 1
          %v220 = vld [vmem:[%s219] ss:$2 sm:$0x7]
          %v221 = vmul.f32 %v220, 0.001953125
          %v222 = vmul.f32 %v218, %v218
          %v223 = vsub.f32 %v221, %v222
          %v224 = vld [vmem:[%s2] ss:$2 sm:$0x7]
          %v225 = vadd.f32 %v223, 0.001
          %v226 = vrsqrt.pop %v225
          %v227 = vmul.f32 %v224, %v226
          %v228 = vlaneseq
          %vm229 = vcmp.ge.s32.totalorder %v228, 0
          %vm230 = vcmp.lt.s32.totalorder %v228, 288
          %vm231 = vmand %vm229, %vm230
          %232 = vst.msk [vmem:[#allocation3] ss:$2 sm:$0x7] %vm231, %v227
          %s233 = scalar_lea.vmem %s2, 1
          %v234 = vld [vmem:[%s233] ss:$2 sm:$0x7]
          %v235 = vmul.f32 %v218, %v227
          %v236 = vsub.f32 %v234, %v235
          %s237 = scalar_lea.vmem [#allocation3], 1
          %238 = vst.msk [vmem:[%s237] ss:$2 sm:$0x7] %vm231, %v236
        $region40: #{depthwise_conv_bn.1} parent=31 // pred_fallthru
          _
        %v239 = vld [vmem:[%s1] sm:$0x77]
        %v240 = vld [vmem:[%s1 + $0x8] sm:$0x7]
        %v241 = vld [vmem:[%s1 + $0xc] sm:$0x77]
        %v242 = vld [vmem:[%s1 + $0x14] sm:$0x7]
        %v243 = vld [vmem:[%s1 + $0x18] sm:$0x77]
        %v244 = vld [vmem:[%s1 + $0x20] sm:$0x7]
        %s245 = smul.u32 %s24, 8
        // Predicated region
        $region41: #{depthwise_conv_bn.1} parent=31 // pred_check
          %p246 = pneg %p201
        $region42: #{depthwise_conv_bn.1} parent=31 // pred_check_branch
          %248 = sbr.rel (%p246) target = $region44
        $region43: #{depthwise_conv_bn.1} parent=31 // pred_region
          loop: start=0, step=1, limit=8
          $region45: #{depthwise_conv_bn.1} parent=43 // loop_pre_header
            _
          $region46: #{depthwise_conv_bn.1} parent=43 // loop_header
            %s250 = sphi 0, %s254
            %p251 = scmp.ge.s32.totalorder %s250, 8
            %v255 = vphi 0.0, %v935
            %v256 = vphi 0.0, %v936
            %v257 = vphi 0.0, %v937
            %v258 = vphi 0.0, %v967
            %v259 = vphi 0.0, %v968
            %v260 = vphi 0.0, %v969
          $region47: #{depthwise_conv_bn.1} parent=43 // loop_header_branch
            %253 = sbr.rel (%p251) target = $region51
          $region48: #{depthwise_conv_bn.1} parent=43 // loop_body
            %s261 = sadd.s32 %s245, %s250
            %s262 = sadd.s32 %s261, 4294967295
            %p263 = scmp.ge.s32.totalorder %s262, 0
            %p264 = scmp.lt.s32.totalorder %s262, 16
            %p265 = pnand %p263, %p264
            %p266 = pneg %p265
            %s267 = scalar_select %p266, 1.0, 0.0
            %p268 = scmp.gt.s32.totalorder %s262, 0
            %s269 = scalar_select %p268, %s262, 0
            %p270 = scmp.lt.s32.totalorder %s269, 15
            %s271 = scalar_select %p270, %s269, 15
            %s272 = smul.u32 %s271, 9
            %s273 = smul.addr %s272, 4
            %s274 = scalar_lea.vmem %s193, %s273
            %v275 = vld [vmem:[%s274] sm:$0xff]
            %v276 = vld [vmem:[%s274 + $0x8] sm:$0xf]
            %v277 = vld [vmem:[%s274 + $0xc] sm:$0xff]
            %v278 = vld [vmem:[%s274 + $0x14] sm:$0xf]
            %v279 = vld [vmem:[%s274 + $0x18] sm:$0x11]
            %v280 = vld [vmem:[%s274 + $0x20] sm:$0x1]
            %v281 = vunpack.c.l.bf16 %v275
            %v282 = vunpack.c.h.bf16 %v275
            %v283 = vunpack.c.l.bf16 %v276
            %v284 = vunpack.c.l.bf16 %v277
            %v285 = vunpack.c.h.bf16 %v277
            %v286 = vunpack.c.l.bf16 %v278
            %v287 = vunpack.c.l.bf16 %v279
            %v288 = vunpack.c.h.bf16 %v279
            %v289 = vunpack.c.l.bf16 %v280
            %v290 = vstv %s267
            %v291 = vmul.f32 %v239, %v290
            %v292 = vmul.f32 %v240, %v290
            %v295 = vlaneseq
            %v296 = vshrl.u32 %v295, 7
            %v297 = vsub.s32 0, %v296
            %v298 = vrot.slane %v291, %v297
            %v299 = vlaneseq
            %v300 = vshrl.u32 %v299, 7
            %v301 = vsub.s32 4, %v300
            %v302 = vrot.slane %v291, %v301
            %v303 = vlaneseq
            %v304 = vshrl.u32 %v303, 7
            %v305 = vsub.s32 0, %v304
            %v306 = vrot.slane %v292, %v305
            %v310 = vlaneseq
            %v311 = vshrl.u32 %v310, 7
            %v312 = vsub.s32 0, %v311
            %v313 = vrot.slane %v298, %v312
            %v314 = vlaneseq
            %v315 = vshrl.u32 %v314, 7
            %v316 = vsub.s32 0, %v315
            %v317 = vrot.slane %v302, %v316
            %v318 = vlaneseq
            %v319 = vshrl.u32 %v318, 7
            %v320 = vsub.s32 0, %v319
            %v321 = vrot.slane %v306, %v320
            %v322 = vmul.f32 %v281, %v313
            %v323 = vmul.f32 %v282, %v317
            %v324 = vmul.f32 %v283, %v321
            %v325 = vmul.f32 %v284, %v313
            %v326 = vmul.f32 %v285, %v317
            %v327 = vmul.f32 %v286, %v321
            %v328 = vadd.f32 %v322, 0.0
            %v329 = vadd.f32 %v323, 0.0
            %v330 = vadd.f32 %v324, 0.0
            %v331 = vadd.f32 %v325, 0.0
            %v332 = vadd.f32 %v326, 0.0
            %v333 = vadd.f32 %v327, 0.0
            %v334 = vlaneseq
            %v335 = vshrl.u32 %v334, 7
            %v336 = vsub.s32 1, %v335
            %v337 = vrot.slane %v291, %v336
            %v338 = vlaneseq
            %v339 = vshrl.u32 %v338, 7
            %v340 = vsub.s32 5, %v339
            %v341 = vrot.slane %v291, %v340
            %v342 = vlaneseq
            %v343 = vshrl.u32 %v342, 7
            %v344 = vsub.s32 1, %v343
            %v345 = vrot.slane %v292, %v344
            %v349 = vlaneseq
            %v350 = vshrl.u32 %v349, 7
            %v351 = vsub.s32 1, %v350
            %v352 = vrot.slane %v337, %v351
            %v353 = vlaneseq
            %v354 = vshrl.u32 %v353, 7
            %v355 = vsub.s32 1, %v354
            %v356 = vrot.slane %v341, %v355
            %v357 = vlaneseq
            %v358 = vshrl.u32 %v357, 7
            %v359 = vsub.s32 1, %v358
            %v360 = vrot.slane %v345, %v359
            %v361 = vmul.f32 %v281, %v352
            %v362 = vmul.f32 %v282, %v356
            %v363 = vmul.f32 %v283, %v360
            %v364 = vmul.f32 %v284, %v352
            %v365 = vmul.f32 %v285, %v356
            %v366 = vmul.f32 %v286, %v360
            %v367 = vmul.f32 %v287, %v352
            %v368 = vmul.f32 %v288, %v356
            %v369 = vmul.f32 %v289, %v360
            %vm379 = vcmask 1046528
            %v380 = vrot.slane %v361, 1
            %v381 = vrot.slane %v364, 1
            %v382 = vsel %vm379, %v380, %v381
            %v383 = vrot.slane %v362, 1
            %v384 = vrot.slane %v365, 1
            %v385 = vsel %vm379, %v383, %v384
            %v386 = vrot.slane %v363, 1
            %v387 = vrot.slane %v366, 1
            %v388 = vsel %vm379, %v386, %v387
            %v389 = vrot.slane %v367, 1
            %v390 = vsel %vm379, %v381, %v389
            %v391 = vrot.slane %v368, 1
            %v392 = vsel %vm379, %v384, %v391
            %v393 = vrot.slane %v369, 1
            %v394 = vsel %vm379, %v387, %v393
            %v401 = vadd.f32 %v328, %v382
            %v402 = vadd.f32 %v329, %v385
            %v403 = vadd.f32 %v330, %v388
            %v404 = vadd.f32 %v331, %v390
            %v405 = vadd.f32 %v332, %v392
            %v406 = vadd.f32 %v333, %v394
            %v407 = vlaneseq
            %v408 = vshrl.u32 %v407, 7
            %v409 = vsub.s32 2, %v408
            %v410 = vrot.slane %v291, %v409
            %v411 = vlaneseq
            %v412 = vshrl.u32 %v411, 7
            %v413 = vsub.s32 6, %v412
            %v414 = vrot.slane %v291, %v413
            %v415 = vlaneseq
            %v416 = vshrl.u32 %v415, 7
            %v417 = vsub.s32 2, %v416
            %v418 = vrot.slane %v292, %v417
            %v422 = vlaneseq
            %v423 = vshrl.u32 %v422, 7
            %v424 = vsub.s32 2, %v423
            %v425 = vrot.slane %v410, %v424
            %v426 = vlaneseq
            %v427 = vshrl.u32 %v426, 7
            %v428 = vsub.s32 2, %v427
            %v429 = vrot.slane %v414, %v428
            %v430 = vlaneseq
            %v431 = vshrl.u32 %v430, 7
            %v432 = vsub.s32 2, %v431
            %v433 = vrot.slane %v418, %v432
            %v434 = vmul.f32 %v281, %v425
            %v435 = vmul.f32 %v282, %v429
            %v436 = vmul.f32 %v283, %v433
            %v437 = vmul.f32 %v284, %v425
            %v438 = vmul.f32 %v285, %v429
            %v439 = vmul.f32 %v286, %v433
            %v440 = vmul.f32 %v287, %v425
            %v441 = vmul.f32 %v288, %v429
            %v442 = vmul.f32 %v289, %v433
            %vm452 = vcmask 1045504
            %v453 = vrot.slane %v434, 2
            %v454 = vrot.slane %v437, 2
            %v455 = vsel %vm452, %v453, %v454
            %v456 = vrot.slane %v435, 2
            %v457 = vrot.slane %v438, 2
            %v458 = vsel %vm452, %v456, %v457
            %v459 = vrot.slane %v436, 2
            %v460 = vrot.slane %v439, 2
            %v461 = vsel %vm452, %v459, %v460
            %v462 = vrot.slane %v440, 2
            %v463 = vsel %vm452, %v454, %v462
            %v464 = vrot.slane %v441, 2
            %v465 = vsel %vm452, %v457, %v464
            %v466 = vrot.slane %v442, 2
            %v467 = vsel %vm452, %v460, %v466
            %v474 = vadd.f32 %v401, %v455
            %v475 = vadd.f32 %v402, %v458
            %v476 = vadd.f32 %v403, %v461
            %v477 = vadd.f32 %v404, %v463
            %v478 = vadd.f32 %v405, %v465
            %v479 = vadd.f32 %v406, %v467
            %p480 = scmp.ge.s32.totalorder %s261, 0
            %p481 = scmp.lt.s32.totalorder %s261, 16
            %p482 = pnand %p480, %p481
            %p483 = pneg %p482
            %s484 = scalar_select %p483, 1.0, 0.0
            %p485 = scmp.gt.s32.totalorder %s261, 0
            %s486 = scalar_select %p485, %s261, 0
            %p487 = scmp.lt.s32.totalorder %s486, 15
            %s488 = scalar_select %p487, %s486, 15
            %s489 = smul.u32 %s488, 9
            %s490 = smul.addr %s489, 4
            %s491 = scalar_lea.vmem %s193, %s490
            %v492 = vld [vmem:[%s491] sm:$0xff]
            %v493 = vld [vmem:[%s491 + $0x8] sm:$0xf]
            %v494 = vld [vmem:[%s491 + $0xc] sm:$0xff]
            %v495 = vld [vmem:[%s491 + $0x14] sm:$0xf]
            %v496 = vld [vmem:[%s491 + $0x18] sm:$0x11]
            %v497 = vld [vmem:[%s491 + $0x20] sm:$0x1]
            %v498 = vunpack.c.l.bf16 %v492
            %v499 = vunpack.c.h.bf16 %v492
            %v500 = vunpack.c.l.bf16 %v493
            %v501 = vunpack.c.l.bf16 %v494
            %v502 = vunpack.c.h.bf16 %v494
            %v503 = vunpack.c.l.bf16 %v495
            %v504 = vunpack.c.l.bf16 %v496
            %v505 = vunpack.c.h.bf16 %v496
            %v506 = vunpack.c.l.bf16 %v497
            %v507 = vstv %s484
            %v508 = vmul.f32 %v241, %v507
            %v509 = vmul.f32 %v242, %v507
            %v512 = vlaneseq
            %v513 = vshrl.u32 %v512, 7
            %v514 = vsub.s32 0, %v513
            %v515 = vrot.slane %v508, %v514
            %v516 = vlaneseq
            %v517 = vshrl.u32 %v516, 7
            %v518 = vsub.s32 4, %v517
            %v519 = vrot.slane %v508, %v518
            %v520 = vlaneseq
            %v521 = vshrl.u32 %v520, 7
            %v522 = vsub.s32 0, %v521
            %v523 = vrot.slane %v509, %v522
            %v527 = vlaneseq
            %v528 = vshrl.u32 %v527, 7
            %v529 = vsub.s32 0, %v528
            %v530 = vrot.slane %v515, %v529
            %v531 = vlaneseq
            %v532 = vshrl.u32 %v531, 7
            %v533 = vsub.s32 0, %v532
            %v534 = vrot.slane %v519, %v533
            %v535 = vlaneseq
            %v536 = vshrl.u32 %v535, 7
            %v537 = vsub.s32 0, %v536
            %v538 = vrot.slane %v523, %v537
            %v539 = vmul.f32 %v498, %v530
            %v540 = vmul.f32 %v499, %v534
            %v541 = vmul.f32 %v500, %v538
            %v542 = vmul.f32 %v501, %v530
            %v543 = vmul.f32 %v502, %v534
            %v544 = vmul.f32 %v503, %v538
            %v545 = vadd.f32 %v474, %v539
            %v546 = vadd.f32 %v475, %v540
            %v547 = vadd.f32 %v476, %v541
            %v548 = vadd.f32 %v477, %v542
            %v549 = vadd.f32 %v478, %v543
            %v550 = vadd.f32 %v479, %v544
            %v551 = vlaneseq
            %v552 = vshrl.u32 %v551, 7
            %v553 = vsub.s32 1, %v552
            %v554 = vrot.slane %v508, %v553
            %v555 = vlaneseq
            %v556 = vshrl.u32 %v555, 7
            %v557 = vsub.s32 5, %v556
            %v558 = vrot.slane %v508, %v557
            %v559 = vlaneseq
            %v560 = vshrl.u32 %v559, 7
            %v561 = vsub.s32 1, %v560
            %v562 = vrot.slane %v509, %v561
            %v566 = vlaneseq
            %v567 = vshrl.u32 %v566, 7
            %v568 = vsub.s32 1, %v567
            %v569 = vrot.slane %v554, %v568
            %v570 = vlaneseq
            %v571 = vshrl.u32 %v570, 7
            %v572 = vsub.s32 1, %v571
            %v573 = vrot.slane %v558, %v572
            %v574 = vlaneseq
            %v575 = vshrl.u32 %v574, 7
            %v576 = vsub.s32 1, %v575
            %v577 = vrot.slane %v562, %v576
            %v578 = vmul.f32 %v498, %v569
            %v579 = vmul.f32 %v499, %v573
            %v580 = vmul.f32 %v500, %v577
            %v581 = vmul.f32 %v501, %v569
            %v582 = vmul.f32 %v502, %v573
            %v583 = vmul.f32 %v503, %v577
            %v584 = vmul.f32 %v504, %v569
            %v585 = vmul.f32 %v505, %v573
            %v586 = vmul.f32 %v506, %v577
            %v596 = vrot.slane %v578, 1
            %v597 = vrot.slane %v581, 1
            %v598 = vsel %vm379, %v596, %v597
            %v599 = vrot.slane %v579, 1
            %v600 = vrot.slane %v582, 1
            %v601 = vsel %vm379, %v599, %v600
            %v602 = vrot.slane %v580, 1
            %v603 = vrot.slane %v583, 1
            %v604 = vsel %vm379, %v602, %v603
            %v605 = vrot.slane %v584, 1
            %v606 = vsel %vm379, %v597, %v605
            %v607 = vrot.slane %v585, 1
            %v608 = vsel %vm379, %v600, %v607
            %v609 = vrot.slane %v586, 1
            %v610 = vsel %vm379, %v603, %v609
            %v617 = vadd.f32 %v545, %v598
            %v618 = vadd.f32 %v546, %v601
            %v619 = vadd.f32 %v547, %v604
            %v620 = vadd.f32 %v548, %v606
            %v621 = vadd.f32 %v549, %v608
            %v622 = vadd.f32 %v550, %v610
            %v623 = vlaneseq
            %v624 = vshrl.u32 %v623, 7
            %v625 = vsub.s32 2, %v624
            %v626 = vrot.slane %v508, %v625
            %v627 = vlaneseq
            %v628 = vshrl.u32 %v627, 7
            %v629 = vsub.s32 6, %v628
            %v630 = vrot.slane %v508, %v629
            %v631 = vlaneseq
            %v632 = vshrl.u32 %v631, 7
            %v633 = vsub.s32 2, %v632
            %v634 = vrot.slane %v509, %v633
            %v638 = vlaneseq
            %v639 = vshrl.u32 %v638, 7
            %v640 = vsub.s32 2, %v639
            %v641 = vrot.slane %v626, %v640
            %v642 = vlaneseq
            %v643 = vshrl.u32 %v642, 7
            %v644 = vsub.s32 2, %v643
            %v645 = vrot.slane %v630, %v644
            %v646 = vlaneseq
            %v647 = vshrl.u32 %v646, 7
            %v648 = vsub.s32 2, %v647
            %v649 = vrot.slane %v634, %v648
            %v650 = vmul.f32 %v498, %v641
            %v651 = vmul.f32 %v499, %v645
            %v652 = vmul.f32 %v500, %v649
            %v653 = vmul.f32 %v501, %v641
            %v654 = vmul.f32 %v502, %v645
            %v655 = vmul.f32 %v503, %v649
            %v656 = vmul.f32 %v504, %v641
            %v657 = vmul.f32 %v505, %v645
            %v658 = vmul.f32 %v506, %v649
            %v668 = vrot.slane %v650, 2
            %v669 = vrot.slane %v653, 2
            %v670 = vsel %vm452, %v668, %v669
            %v671 = vrot.slane %v651, 2
            %v672 = vrot.slane %v654, 2
            %v673 = vsel %vm452, %v671, %v672
            %v674 = vrot.slane %v652, 2
            %v675 = vrot.slane %v655, 2
            %v676 = vsel %vm452, %v674, %v675
            %v677 = vrot.slane %v656, 2
            %v678 = vsel %vm452, %v669, %v677
            %v679 = vrot.slane %v657, 2
            %v680 = vsel %vm452, %v672, %v679
            %v681 = vrot.slane %v658, 2
            %v682 = vsel %vm452, %v675, %v681
            %v689 = vadd.f32 %v617, %v670
            %v690 = vadd.f32 %v618, %v673
            %v691 = vadd.f32 %v619, %v676
            %v692 = vadd.f32 %v620, %v678
            %v693 = vadd.f32 %v621, %v680
            %v694 = vadd.f32 %v622, %v682
            %s695 = sadd.s32 %s261, 1
            %p696 = scmp.ge.s32.totalorder %s695, 0
            %p697 = scmp.lt.s32.totalorder %s695, 16
            %p698 = pnand %p696, %p697
            %p699 = pneg %p698
            %s700 = scalar_select %p699, 1.0, 0.0
            %p701 = scmp.gt.s32.totalorder %s695, 0
            %s702 = scalar_select %p701, %s695, 0
            %p703 = scmp.lt.s32.totalorder %s702, 15
            %s704 = scalar_select %p703, %s702, 15
            %s705 = smul.u32 %s704, 9
            %s706 = smul.addr %s705, 4
            %s707 = scalar_lea.vmem %s193, %s706
            %v708 = vld [vmem:[%s707] sm:$0xff]
            %v709 = vld [vmem:[%s707 + $0x8] sm:$0xf]
            %v710 = vld [vmem:[%s707 + $0xc] sm:$0xff]
            %v711 = vld [vmem:[%s707 + $0x14] sm:$0xf]
            %v712 = vld [vmem:[%s707 + $0x18] sm:$0x11]
            %v713 = vld [vmem:[%s707 + $0x20] sm:$0x1]
            %v714 = vunpack.c.l.bf16 %v708
            %v715 = vunpack.c.h.bf16 %v708
            %v716 = vunpack.c.l.bf16 %v709
            %v717 = vunpack.c.l.bf16 %v710
            %v718 = vunpack.c.h.bf16 %v710
            %v719 = vunpack.c.l.bf16 %v711
            %v720 = vunpack.c.l.bf16 %v712
            %v721 = vunpack.c.h.bf16 %v712
            %v722 = vunpack.c.l.bf16 %v713
            %v723 = vstv %s700
            %v724 = vmul.f32 %v243, %v723
            %v725 = vmul.f32 %v244, %v723
            %v728 = vlaneseq
            %v729 = vshrl.u32 %v728, 7
            %v730 = vsub.s32 0, %v729
            %v731 = vrot.slane %v724, %v730
            %v732 = vlaneseq
            %v733 = vshrl.u32 %v732, 7
            %v734 = vsub.s32 4, %v733
            %v735 = vrot.slane %v724, %v734
            %v736 = vlaneseq
            %v737 = vshrl.u32 %v736, 7
            %v738 = vsub.s32 0, %v737
            %v739 = vrot.slane %v725, %v738
            %v743 = vlaneseq
            %v744 = vshrl.u32 %v743, 7
            %v745 = vsub.s32 0, %v744
            %v746 = vrot.slane %v731, %v745
            %v747 = vlaneseq
            %v748 = vshrl.u32 %v747, 7
            %v749 = vsub.s32 0, %v748
            %v750 = vrot.slane %v735, %v749
            %v751 = vlaneseq
            %v752 = vshrl.u32 %v751, 7
            %v753 = vsub.s32 0, %v752
            %v754 = vrot.slane %v739, %v753
            %v755 = vmul.f32 %v714, %v746
            %v756 = vmul.f32 %v715, %v750
            %v757 = vmul.f32 %v716, %v754
            %v758 = vmul.f32 %v717, %v746
            %v759 = vmul.f32 %v718, %v750
            %v760 = vmul.f32 %v719, %v754
            %v761 = vadd.f32 %v689, %v755
            %v762 = vadd.f32 %v690, %v756
            %v763 = vadd.f32 %v691, %v757
            %v764 = vadd.f32 %v692, %v758
            %v765 = vadd.f32 %v693, %v759
            %v766 = vadd.f32 %v694, %v760
            %v767 = vlaneseq
            %v768 = vshrl.u32 %v767, 7
            %v769 = vsub.s32 1, %v768
            %v770 = vrot.slane %v724, %v769
            %v771 = vlaneseq
            %v772 = vshrl.u32 %v771, 7
            %v773 = vsub.s32 5, %v772
            %v774 = vrot.slane %v724, %v773
            %v775 = vlaneseq
            %v776 = vshrl.u32 %v775, 7
            %v777 = vsub.s32 1, %v776
            %v778 = vrot.slane %v725, %v777
            %v782 = vlaneseq
            %v783 = vshrl.u32 %v782, 7
            %v784 = vsub.s32 1, %v783
            %v785 = vrot.slane %v770, %v784
            %v786 = vlaneseq
            %v787 = vshrl.u32 %v786, 7
            %v788 = vsub.s32 1, %v787
            %v789 = vrot.slane %v774, %v788
            %v790 = vlaneseq
            %v791 = vshrl.u32 %v790, 7
            %v792 = vsub.s32 1, %v791
            %v793 = vrot.slane %v778, %v792
            %v794 = vmul.f32 %v714, %v785
            %v795 = vmul.f32 %v715, %v789
            %v796 = vmul.f32 %v716, %v793
            %v797 = vmul.f32 %v717, %v785
            %v798 = vmul.f32 %v718, %v789
            %v799 = vmul.f32 %v719, %v793
            %v800 = vmul.f32 %v720, %v785
            %v801 = vmul.f32 %v721, %v789
            %v802 = vmul.f32 %v722, %v793
            %v812 = vrot.slane %v794, 1
            %v813 = vrot.slane %v797, 1
            %v814 = vsel %vm379, %v812, %v813
            %v815 = vrot.slane %v795, 1
            %v816 = vrot.slane %v798, 1
            %v817 = vsel %vm379, %v815, %v816
            %v818 = vrot.slane %v796, 1
            %v819 = vrot.slane %v799, 1
            %v820 = vsel %vm379, %v818, %v819
            %v821 = vrot.slane %v800, 1
            %v822 = vsel %vm379, %v813, %v821
            %v823 = vrot.slane %v801, 1
            %v824 = vsel %vm379, %v816, %v823
            %v825 = vrot.slane %v802, 1
            %v826 = vsel %vm379, %v819, %v825
            %v833 = vadd.f32 %v761, %v814
            %v834 = vadd.f32 %v762, %v817
            %v835 = vadd.f32 %v763, %v820
            %v836 = vadd.f32 %v764, %v822
            %v837 = vadd.f32 %v765, %v824
            %v838 = vadd.f32 %v766, %v826
            %v839 = vlaneseq
            %v840 = vshrl.u32 %v839, 7
            %v841 = vsub.s32 2, %v840
            %v842 = vrot.slane %v724, %v841
            %v843 = vlaneseq
            %v844 = vshrl.u32 %v843, 7
            %v845 = vsub.s32 6, %v844
            %v846 = vrot.slane %v724, %v845
            %v847 = vlaneseq
            %v848 = vshrl.u32 %v847, 7
            %v849 = vsub.s32 2, %v848
            %v850 = vrot.slane %v725, %v849
            %v854 = vlaneseq
            %v855 = vshrl.u32 %v854, 7
            %v856 = vsub.s32 2, %v855
            %v857 = vrot.slane %v842, %v856
            %v858 = vlaneseq
            %v859 = vshrl.u32 %v858, 7
            %v860 = vsub.s32 2, %v859
            %v861 = vrot.slane %v846, %v860
            %v862 = vlaneseq
            %v863 = vshrl.u32 %v862, 7
            %v864 = vsub.s32 2, %v863
            %v865 = vrot.slane %v850, %v864
            %v866 = vmul.f32 %v714, %v857
            %v867 = vmul.f32 %v715, %v861
            %v868 = vmul.f32 %v716, %v865
            %v869 = vmul.f32 %v717, %v857
            %v870 = vmul.f32 %v718, %v861
            %v871 = vmul.f32 %v719, %v865
            %v872 = vmul.f32 %v720, %v857
            %v873 = vmul.f32 %v721, %v861
            %v874 = vmul.f32 %v722, %v865
            %v884 = vrot.slane %v866, 2
            %v885 = vrot.slane %v869, 2
            %v886 = vsel %vm452, %v884, %v885
            %v887 = vrot.slane %v867, 2
            %v888 = vrot.slane %v870, 2
            %v889 = vsel %vm452, %v887, %v888
            %v890 = vrot.slane %v868, 2
            %v891 = vrot.slane %v871, 2
            %v892 = vsel %vm452, %v890, %v891
            %v893 = vrot.slane %v872, 2
            %v894 = vsel %vm452, %v885, %v893
            %v895 = vrot.slane %v873, 2
            %v896 = vsel %vm452, %v888, %v895
            %v897 = vrot.slane %v874, 2
            %v898 = vsel %vm452, %v891, %v897
            %v905 = vadd.f32 %v833, %v886
            %v906 = vadd.f32 %v834, %v889
            %v907 = vadd.f32 %v835, %v892
            %v908 = vadd.f32 %v836, %v894
            %v909 = vadd.f32 %v837, %v896
            %v910 = vadd.f32 %v838, %v898
            %v911 = vadd.f32 %v905, %v908
            %v912 = vrot.slane %v911, 4
            %v913 = vadd.f32 %v911, %v912
            %v914 = vrot.slane %v913, 2
            %v915 = vadd.f32 %v913, %v914
            %v916 = vrot.slane %v915, 1
            %v917 = vadd.f32 %v915, %v916
            %v918 = vadd.f32 %v906, %v909
            %v919 = vrot.slane %v918, 4
            %v920 = vadd.f32 %v918, %v919
            %v921 = vrot.slane %v920, 2
            %v922 = vadd.f32 %v920, %v921
            %v923 = vrot.slane %v922, 1
            %v924 = vadd.f32 %v922, %v923
            %vm925 = vcmask 261120
            %v926 = vsel %vm925, %v907, 0.0
            %v927 = vsel %vm925, %v910, 0.0
            %v928 = vadd.f32 %v926, %v927
            %v929 = vrot.slane %v928, 4
            %v930 = vadd.f32 %v928, %v929
            %v931 = vrot.slane %v930, 2
            %v932 = vadd.f32 %v930, %v931
            %v933 = vrot.slane %v932, 1
            %v934 = vadd.f32 %v932, %v933
            %v935 = vadd.f32 %v255, %v917
            %v936 = vadd.f32 %v256, %v924
            %v937 = vadd.f32 %v257, %v934
            %v938 = vmul.f32 %v905, %v905
            %v939 = vmul.f32 %v906, %v906
            %v940 = vmul.f32 %v907, %v907
            %v941 = vmul.f32 %v908, %v908
            %v942 = vmul.f32 %v909, %v909
            %v943 = vmul.f32 %v910, %v910
            %v944 = vadd.f32 %v938, %v941
            %v945 = vrot.slane %v944, 4
            %v946 = vadd.f32 %v944, %v945
            %v947 = vrot.slane %v946, 2
            %v948 = vadd.f32 %v946, %v947
            %v949 = vrot.slane %v948, 1
            %v950 = vadd.f32 %v948, %v949
            %v951 = vadd.f32 %v939, %v942
            %v952 = vrot.slane %v951, 4
            %v953 = vadd.f32 %v951, %v952
            %v954 = vrot.slane %v953, 2
            %v955 = vadd.f32 %v953, %v954
            %v956 = vrot.slane %v955, 1
            %v957 = vadd.f32 %v955, %v956
            %v958 = vsel %vm925, %v940, 0.0
            %v959 = vsel %vm925, %v943, 0.0
            %v960 = vadd.f32 %v958, %v959
            %v961 = vrot.slane %v960, 4
            %v962 = vadd.f32 %v960, %v961
            %v963 = vrot.slane %v962, 2
            %v964 = vadd.f32 %v962, %v963
            %v965 = vrot.slane %v964, 1
            %v966 = vadd.f32 %v964, %v965
            %v967 = vadd.f32 %v258, %v950
            %v968 = vadd.f32 %v259, %v957
            %v969 = vadd.f32 %v260, %v966
          $region49: #{depthwise_conv_bn.1} parent=43 // loop_footer
            %s254 = sadd.s32 1, %s250
          $region50: #{depthwise_conv_bn.1} parent=43 // loop_footer_branch
            %249 = sbr.rel target = $region46
          $region51: #{depthwise_conv_bn.1} parent=43 // loop_exit
            _
          %v970 = vld [vmem:[#allocation2] ss:$2 sm:$0x7]
          %v974 = vcombine.low %v255, %v256
          %v976 = vunpack.c.l.s4 1966171168
          %v977 = vunpack.c.0.s8 %v976
          %v978 = vlaneseq
          %v979 = vshrl.u32 %v978, 7
          %v980 = vsub.s32 %v977, %v979
          %v981 = vrot.slane %v974, %v980
          %v983 = vunpack.c.l.s4 1966171168
          %v984 = vunpack.c.0.s8 %v983
          %v985 = vlaneseq
          %v986 = vshrl.u32 %v985, 7
          %v987 = vsub.s32 %v984, %v986
          %v988 = vrot.slane %v257, %v987
          %v989 = vcombine.low %v981, %v988
          %v991 = vunpack.c.l.s4 1966171168
          %v992 = vunpack.c.0.s8 %v991
          %v993 = vlaneseq
          %v994 = vshrl.u32 %v993, 7
          %v995 = vsub.s32 %v992, %v994
          %v996 = vrot.slane %v989, %v995
          %v998 = vadd.f32 %v970, %v996
          %v999 = vlaneseq
          %vm1000 = vcmp.ge.s32.totalorder %v999, 0
          %vm1001 = vcmp.lt.s32.totalorder %v999, 288
          %vm1002 = vmand %vm1000, %vm1001
          %1003 = vst.msk [vmem:[#allocation2] ss:$2 sm:$0x7] %vm1002, %v998
          %s1004 = scalar_lea.vmem [#allocation2], 1
          %v1005 = vld [vmem:[%s1004] ss:$2 sm:$0x7]
          %v1009 = vcombine.low %v258, %v259
          %v1011 = vunpack.c.l.s4 1966171168
          %v1012 = vunpack.c.0.s8 %v1011
          %v1013 = vlaneseq
          %v1014 = vshrl.u32 %v1013, 7
          %v1015 = vsub.s32 %v1012, %v1014
          %v1016 = vrot.slane %v1009, %v1015
          %v1018 = vunpack.c.l.s4 1966171168
          %v1019 = vunpack.c.0.s8 %v1018
          %v1020 = vlaneseq
          %v1021 = vshrl.u32 %v1020, 7
          %v1022 = vsub.s32 %v1019, %v1021
          %v1023 = vrot.slane %v260, %v1022
          %v1024 = vcombine.low %v1016, %v1023
          %v1026 = vunpack.c.l.s4 1966171168
          %v1027 = vunpack.c.0.s8 %v1026
          %v1028 = vlaneseq
          %v1029 = vshrl.u32 %v1028, 7
          %v1030 = vsub.s32 %v1027, %v1029
          %v1031 = vrot.slane %v1024, %v1030
          %v1033 = vadd.f32 %v1005, %v1031
          %1034 = vst.msk [vmem:[%s1004] ss:$2 sm:$0x7] %vm1002, %v1033
        $region44: #{depthwise_conv_bn.1} parent=31 // pred_fallthru
          _
        // Predicated region
        $region52: #{depthwise_conv_bn.1} parent=31 // pred_check
          %p1035 = pneg %p212
        $region53: #{depthwise_conv_bn.1} parent=31 // pred_check_branch
          %1037 = sbr.rel (%p1035) target = $region55
        $region54: #{depthwise_conv_bn.1} parent=31 // pred_region
          %v1038 = vld [vmem:[#allocation3] ss:$2 sm:$0x7]
          %s1039 = scalar_lea.vmem [#allocation3], 1
          %v1040 = vld [vmem:[%s1039] ss:$2 sm:$0x7]
          loop: start=0, step=1, limit=8
          $region56: #{depthwise_conv_bn.1} parent=54 // loop_pre_header
            _
          $region57: #{depthwise_conv_bn.1} parent=54 // loop_header
            %s1042 = sphi 0, %s1046
            %p1043 = scmp.ge.s32.totalorder %s1042, 8
          $region58: #{depthwise_conv_bn.1} parent=54 // loop_header_branch
            %1045 = sbr.rel (%p1043) target = $region62
          $region59: #{depthwise_conv_bn.1} parent=54 // loop_body
            %s1047 = sadd.s32 %s245, %s1042
            %s1048 = sadd.s32 %s1047, 4294967295
            %p1049 = scmp.ge.s32.totalorder %s1048, 0
            %p1050 = scmp.lt.s32.totalorder %s1048, 16
            %p1051 = pnand %p1049, %p1050
            %p1052 = pneg %p1051
            %s1053 = scalar_select %p1052, 1.0, 0.0
            %p1054 = scmp.gt.s32.totalorder %s1048, 0
            %s1055 = scalar_select %p1054, %s1048, 0
            %p1056 = scmp.lt.s32.totalorder %s1055, 15
            %s1057 = scalar_select %p1056, %s1055, 15
            %s1058 = smul.u32 %s1057, 9
            %s1059 = smul.addr %s1058, 4
            %s1060 = scalar_lea.vmem %s193, %s1059
            %v1061 = vld [vmem:[%s1060] sm:$0xff]
            %v1062 = vld [vmem:[%s1060 + $0x8] sm:$0xf]
            %v1063 = vld [vmem:[%s1060 + $0xc] sm:$0xff]
            %v1064 = vld [vmem:[%s1060 + $0x14] sm:$0xf]
            %v1065 = vld [vmem:[%s1060 + $0x18] sm:$0x11]
            %v1066 = vld [vmem:[%s1060 + $0x20] sm:$0x1]
            %v1067 = vunpack.c.l.bf16 %v1061
            %v1068 = vunpack.c.h.bf16 %v1061
            %v1069 = vunpack.c.l.bf16 %v1062
            %v1070 = vunpack.c.l.bf16 %v1063
            %v1071 = vunpack.c.h.bf16 %v1063
            %v1072 = vunpack.c.l.bf16 %v1064
            %v1073 = vunpack.c.l.bf16 %v1065
            %v1074 = vunpack.c.h.bf16 %v1065
            %v1075 = vunpack.c.l.bf16 %v1066
            %v1076 = vstv %s1053
            %v1077 = vmul.f32 %v239, %v1076
            %v1078 = vmul.f32 %v240, %v1076
            %v1081 = vlaneseq
            %v1082 = vshrl.u32 %v1081, 7
            %v1083 = vsub.s32 0, %v1082
            %v1084 = vrot.slane %v1077, %v1083
            %v1085 = vlaneseq
            %v1086 = vshrl.u32 %v1085, 7
            %v1087 = vsub.s32 4, %v1086
            %v1088 = vrot.slane %v1077, %v1087
            %v1089 = vlaneseq
            %v1090 = vshrl.u32 %v1089, 7
            %v1091 = vsub.s32 0, %v1090
            %v1092 = vrot.slane %v1078, %v1091
            %v1096 = vlaneseq
            %v1097 = vshrl.u32 %v1096, 7
            %v1098 = vsub.s32 0, %v1097
            %v1099 = vrot.slane %v1084, %v1098
            %v1100 = vlaneseq
            %v1101 = vshrl.u32 %v1100, 7
            %v1102 = vsub.s32 0, %v1101
            %v1103 = vrot.slane %v1088, %v1102
            %v1104 = vlaneseq
            %v1105 = vshrl.u32 %v1104, 7
            %v1106 = vsub.s32 0, %v1105
            %v1107 = vrot.slane %v1092, %v1106
            %v1108 = vmul.f32 %v1067, %v1099
            %v1109 = vmul.f32 %v1068, %v1103
            %v1110 = vmul.f32 %v1069, %v1107
            %v1111 = vmul.f32 %v1070, %v1099
            %v1112 = vmul.f32 %v1071, %v1103
            %v1113 = vmul.f32 %v1072, %v1107
            %v1114 = vadd.f32 %v1108, 0.0
            %v1115 = vadd.f32 %v1109, 0.0
            %v1116 = vadd.f32 %v1110, 0.0
            %v1117 = vadd.f32 %v1111, 0.0
            %v1118 = vadd.f32 %v1112, 0.0
            %v1119 = vadd.f32 %v1113, 0.0
            %v1120 = vlaneseq
            %v1121 = vshrl.u32 %v1120, 7
            %v1122 = vsub.s32 1, %v1121
            %v1123 = vrot.slane %v1077, %v1122
            %v1124 = vlaneseq
            %v1125 = vshrl.u32 %v1124, 7
            %v1126 = vsub.s32 5, %v1125
            %v1127 = vrot.slane %v1077, %v1126
            %v1128 = vlaneseq
            %v1129 = vshrl.u32 %v1128, 7
            %v1130 = vsub.s32 1, %v1129
            %v1131 = vrot.slane %v1078, %v1130
            %v1135 = vlaneseq
            %v1136 = vshrl.u32 %v1135, 7
            %v1137 = vsub.s32 1, %v1136
            %v1138 = vrot.slane %v1123, %v1137
            %v1139 = vlaneseq
            %v1140 = vshrl.u32 %v1139, 7
            %v1141 = vsub.s32 1, %v1140
            %v1142 = vrot.slane %v1127, %v1141
            %v1143 = vlaneseq
            %v1144 = vshrl.u32 %v1143, 7
            %v1145 = vsub.s32 1, %v1144
            %v1146 = vrot.slane %v1131, %v1145
            %v1147 = vmul.f32 %v1067, %v1138
            %v1148 = vmul.f32 %v1068, %v1142
            %v1149 = vmul.f32 %v1069, %v1146
            %v1150 = vmul.f32 %v1070, %v1138
            %v1151 = vmul.f32 %v1071, %v1142
            %v1152 = vmul.f32 %v1072, %v1146
            %v1153 = vmul.f32 %v1073, %v1138
            %v1154 = vmul.f32 %v1074, %v1142
            %v1155 = vmul.f32 %v1075, %v1146
            %vm1165 = vcmask 1046528
            %v1166 = vrot.slane %v1147, 1
            %v1167 = vrot.slane %v1150, 1
            %v1168 = vsel %vm1165, %v1166, %v1167
            %v1169 = vrot.slane %v1148, 1
            %v1170 = vrot.slane %v1151, 1
            %v1171 = vsel %vm1165, %v1169, %v1170
            %v1172 = vrot.slane %v1149, 1
            %v1173 = vrot.slane %v1152, 1
            %v1174 = vsel %vm1165, %v1172, %v1173
            %v1175 = vrot.slane %v1153, 1
            %v1176 = vsel %vm1165, %v1167, %v1175
            %v1177 = vrot.slane %v1154, 1
            %v1178 = vsel %vm1165, %v1170, %v1177
            %v1179 = vrot.slane %v1155, 1
            %v1180 = vsel %vm1165, %v1173, %v1179
            %v1187 = vadd.f32 %v1114, %v1168
            %v1188 = vadd.f32 %v1115, %v1171
            %v1189 = vadd.f32 %v1116, %v1174
            %v1190 = vadd.f32 %v1117, %v1176
            %v1191 = vadd.f32 %v1118, %v1178
            %v1192 = vadd.f32 %v1119, %v1180
            %v1193 = vlaneseq
            %v1194 = vshrl.u32 %v1193, 7
            %v1195 = vsub.s32 2, %v1194
            %v1196 = vrot.slane %v1077, %v1195
            %v1197 = vlaneseq
            %v1198 = vshrl.u32 %v1197, 7
            %v1199 = vsub.s32 6, %v1198
            %v1200 = vrot.slane %v1077, %v1199
            %v1201 = vlaneseq
            %v1202 = vshrl.u32 %v1201, 7
            %v1203 = vsub.s32 2, %v1202
            %v1204 = vrot.slane %v1078, %v1203
            %v1208 = vlaneseq
            %v1209 = vshrl.u32 %v1208, 7
            %v1210 = vsub.s32 2, %v1209
            %v1211 = vrot.slane %v1196, %v1210
            %v1212 = vlaneseq
            %v1213 = vshrl.u32 %v1212, 7
            %v1214 = vsub.s32 2, %v1213
            %v1215 = vrot.slane %v1200, %v1214
            %v1216 = vlaneseq
            %v1217 = vshrl.u32 %v1216, 7
            %v1218 = vsub.s32 2, %v1217
            %v1219 = vrot.slane %v1204, %v1218
            %v1220 = vmul.f32 %v1067, %v1211
            %v1221 = vmul.f32 %v1068, %v1215
            %v1222 = vmul.f32 %v1069, %v1219
            %v1223 = vmul.f32 %v1070, %v1211
            %v1224 = vmul.f32 %v1071, %v1215
            %v1225 = vmul.f32 %v1072, %v1219
            %v1226 = vmul.f32 %v1073, %v1211
            %v1227 = vmul.f32 %v1074, %v1215
            %v1228 = vmul.f32 %v1075, %v1219
            %vm1238 = vcmask 1045504
            %v1239 = vrot.slane %v1220, 2
            %v1240 = vrot.slane %v1223, 2
            %v1241 = vsel %vm1238, %v1239, %v1240
            %v1242 = vrot.slane %v1221, 2
            %v1243 = vrot.slane %v1224, 2
            %v1244 = vsel %vm1238, %v1242, %v1243
            %v1245 = vrot.slane %v1222, 2
            %v1246 = vrot.slane %v1225, 2
            %v1247 = vsel %vm1238, %v1245, %v1246
            %v1248 = vrot.slane %v1226, 2
            %v1249 = vsel %vm1238, %v1240, %v1248
            %v1250 = vrot.slane %v1227, 2
            %v1251 = vsel %vm1238, %v1243, %v1250
            %v1252 = vrot.slane %v1228, 2
            %v1253 = vsel %vm1238, %v1246, %v1252
            %v1260 = vadd.f32 %v1187, %v1241
            %v1261 = vadd.f32 %v1188, %v1244
            %v1262 = vadd.f32 %v1189, %v1247
            %v1263 = vadd.f32 %v1190, %v1249
            %v1264 = vadd.f32 %v1191, %v1251
            %v1265 = vadd.f32 %v1192, %v1253
            %p1266 = scmp.ge.s32.totalorder %s1047, 0
            %p1267 = scmp.lt.s32.totalorder %s1047, 16
            %p1268 = pnand %p1266, %p1267
            %p1269 = pneg %p1268
            %s1270 = scalar_select %p1269, 1.0, 0.0
            %p1271 = scmp.gt.s32.totalorder %s1047, 0
            %s1272 = scalar_select %p1271, %s1047, 0
            %p1273 = scmp.lt.s32.totalorder %s1272, 15
            %s1274 = scalar_select %p1273, %s1272, 15
            %s1275 = smul.u32 %s1274, 9
            %s1276 = smul.addr %s1275, 4
            %s1277 = scalar_lea.vmem %s193, %s1276
            %v1278 = vld [vmem:[%s1277] sm:$0xff]
            %v1279 = vld [vmem:[%s1277 + $0x8] sm:$0xf]
            %v1280 = vld [vmem:[%s1277 + $0xc] sm:$0xff]
            %v1281 = vld [vmem:[%s1277 + $0x14] sm:$0xf]
            %v1282 = vld [vmem:[%s1277 + $0x18] sm:$0x11]
            %v1283 = vld [vmem:[%s1277 + $0x20] sm:$0x1]
            %v1284 = vunpack.c.l.bf16 %v1278
            %v1285 = vunpack.c.h.bf16 %v1278
            %v1286 = vunpack.c.l.bf16 %v1279
            %v1287 = vunpack.c.l.bf16 %v1280
            %v1288 = vunpack.c.h.bf16 %v1280
            %v1289 = vunpack.c.l.bf16 %v1281
            %v1290 = vunpack.c.l.bf16 %v1282
            %v1291 = vunpack.c.h.bf16 %v1282
            %v1292 = vunpack.c.l.bf16 %v1283
            %v1293 = vstv %s1270
            %v1294 = vmul.f32 %v241, %v1293
            %v1295 = vmul.f32 %v242, %v1293
            %v1298 = vlaneseq
            %v1299 = vshrl.u32 %v1298, 7
            %v1300 = vsub.s32 0, %v1299
            %v1301 = vrot.slane %v1294, %v1300
            %v1302 = vlaneseq
            %v1303 = vshrl.u32 %v1302, 7
            %v1304 = vsub.s32 4, %v1303
            %v1305 = vrot.slane %v1294, %v1304
            %v1306 = vlaneseq
            %v1307 = vshrl.u32 %v1306, 7
            %v1308 = vsub.s32 0, %v1307
            %v1309 = vrot.slane %v1295, %v1308
            %v1313 = vlaneseq
            %v1314 = vshrl.u32 %v1313, 7
            %v1315 = vsub.s32 0, %v1314
            %v1316 = vrot.slane %v1301, %v1315
            %v1317 = vlaneseq
            %v1318 = vshrl.u32 %v1317, 7
            %v1319 = vsub.s32 0, %v1318
            %v1320 = vrot.slane %v1305, %v1319
            %v1321 = vlaneseq
            %v1322 = vshrl.u32 %v1321, 7
            %v1323 = vsub.s32 0, %v1322
            %v1324 = vrot.slane %v1309, %v1323
            %v1325 = vmul.f32 %v1284, %v1316
            %v1326 = vmul.f32 %v1285, %v1320
            %v1327 = vmul.f32 %v1286, %v1324
            %v1328 = vmul.f32 %v1287, %v1316
            %v1329 = vmul.f32 %v1288, %v1320
            %v1330 = vmul.f32 %v1289, %v1324
            %v1331 = vadd.f32 %v1260, %v1325
            %v1332 = vadd.f32 %v1261, %v1326
            %v1333 = vadd.f32 %v1262, %v1327
            %v1334 = vadd.f32 %v1263, %v1328
            %v1335 = vadd.f32 %v1264, %v1329
            %v1336 = vadd.f32 %v1265, %v1330
            %v1337 = vlaneseq
            %v1338 = vshrl.u32 %v1337, 7
            %v1339 = vsub.s32 1, %v1338
            %v1340 = vrot.slane %v1294, %v1339
            %v1341 = vlaneseq
            %v1342 = vshrl.u32 %v1341, 7
            %v1343 = vsub.s32 5, %v1342
            %v1344 = vrot.slane %v1294, %v1343
            %v1345 = vlaneseq
            %v1346 = vshrl.u32 %v1345, 7
            %v1347 = vsub.s32 1, %v1346
            %v1348 = vrot.slane %v1295, %v1347
            %v1352 = vlaneseq
            %v1353 = vshrl.u32 %v1352, 7
            %v1354 = vsub.s32 1, %v1353
            %v1355 = vrot.slane %v1340, %v1354
            %v1356 = vlaneseq
            %v1357 = vshrl.u32 %v1356, 7
            %v1358 = vsub.s32 1, %v1357
            %v1359 = vrot.slane %v1344, %v1358
            %v1360 = vlaneseq
            %v1361 = vshrl.u32 %v1360, 7
            %v1362 = vsub.s32 1, %v1361
            %v1363 = vrot.slane %v1348, %v1362
            %v1364 = vmul.f32 %v1284, %v1355
            %v1365 = vmul.f32 %v1285, %v1359
            %v1366 = vmul.f32 %v1286, %v1363
            %v1367 = vmul.f32 %v1287, %v1355
            %v1368 = vmul.f32 %v1288, %v1359
            %v1369 = vmul.f32 %v1289, %v1363
            %v1370 = vmul.f32 %v1290, %v1355
            %v1371 = vmul.f32 %v1291, %v1359
            %v1372 = vmul.f32 %v1292, %v1363
            %v1382 = vrot.slane %v1364, 1
            %v1383 = vrot.slane %v1367, 1
            %v1384 = vsel %vm1165, %v1382, %v1383
            %v1385 = vrot.slane %v1365, 1
            %v1386 = vrot.slane %v1368, 1
            %v1387 = vsel %vm1165, %v1385, %v1386
            %v1388 = vrot.slane %v1366, 1
            %v1389 = vrot.slane %v1369, 1
            %v1390 = vsel %vm1165, %v1388, %v1389
            %v1391 = vrot.slane %v1370, 1
            %v1392 = vsel %vm1165, %v1383, %v1391
            %v1393 = vrot.slane %v1371, 1
            %v1394 = vsel %vm1165, %v1386, %v1393
            %v1395 = vrot.slane %v1372, 1
            %v1396 = vsel %vm1165, %v1389, %v1395
            %v1403 = vadd.f32 %v1331, %v1384
            %v1404 = vadd.f32 %v1332, %v1387
            %v1405 = vadd.f32 %v1333, %v1390
            %v1406 = vadd.f32 %v1334, %v1392
            %v1407 = vadd.f32 %v1335, %v1394
            %v1408 = vadd.f32 %v1336, %v1396
            %v1409 = vlaneseq
            %v1410 = vshrl.u32 %v1409, 7
            %v1411 = vsub.s32 2, %v1410
            %v1412 = vrot.slane %v1294, %v1411
            %v1413 = vlaneseq
            %v1414 = vshrl.u32 %v1413, 7
            %v1415 = vsub.s32 6, %v1414
            %v1416 = vrot.slane %v1294, %v1415
            %v1417 = vlaneseq
            %v1418 = vshrl.u32 %v1417, 7
            %v1419 = vsub.s32 2, %v1418
            %v1420 = vrot.slane %v1295, %v1419
            %v1424 = vlaneseq
            %v1425 = vshrl.u32 %v1424, 7
            %v1426 = vsub.s32 2, %v1425
            %v1427 = vrot.slane %v1412, %v1426
            %v1428 = vlaneseq
            %v1429 = vshrl.u32 %v1428, 7
            %v1430 = vsub.s32 2, %v1429
            %v1431 = vrot.slane %v1416, %v1430
            %v1432 = vlaneseq
            %v1433 = vshrl.u32 %v1432, 7
            %v1434 = vsub.s32 2, %v1433
            %v1435 = vrot.slane %v1420, %v1434
            %v1436 = vmul.f32 %v1284, %v1427
            %v1437 = vmul.f32 %v1285, %v1431
            %v1438 = vmul.f32 %v1286, %v1435
            %v1439 = vmul.f32 %v1287, %v1427
            %v1440 = vmul.f32 %v1288, %v1431
            %v1441 = vmul.f32 %v1289, %v1435
            %v1442 = vmul.f32 %v1290, %v1427
            %v1443 = vmul.f32 %v1291, %v1431
            %v1444 = vmul.f32 %v1292, %v1435
            %v1454 = vrot.slane %v1436, 2
            %v1455 = vrot.slane %v1439, 2
            %v1456 = vsel %vm1238, %v1454, %v1455
            %v1457 = vrot.slane %v1437, 2
            %v1458 = vrot.slane %v1440, 2
            %v1459 = vsel %vm1238, %v1457, %v1458
            %v1460 = vrot.slane %v1438, 2
            %v1461 = vrot.slane %v1441, 2
            %v1462 = vsel %vm1238, %v1460, %v1461
            %v1463 = vrot.slane %v1442, 2
            %v1464 = vsel %vm1238, %v1455, %v1463
            %v1465 = vrot.slane %v1443, 2
            %v1466 = vsel %vm1238, %v1458, %v1465
            %v1467 = vrot.slane %v1444, 2
            %v1468 = vsel %vm1238, %v1461, %v1467
            %v1475 = vadd.f32 %v1403, %v1456
            %v1476 = vadd.f32 %v1404, %v1459
            %v1477 = vadd.f32 %v1405, %v1462
            %v1478 = vadd.f32 %v1406, %v1464
            %v1479 = vadd.f32 %v1407, %v1466
            %v1480 = vadd.f32 %v1408, %v1468
            %s1481 = sadd.s32 %s1047, 1
            %p1482 = scmp.ge.s32.totalorder %s1481, 0
            %p1483 = scmp.lt.s32.totalorder %s1481, 16
            %p1484 = pnand %p1482, %p1483
            %p1485 = pneg %p1484
            %s1486 = scalar_select %p1485, 1.0, 0.0
            %p1487 = scmp.gt.s32.totalorder %s1481, 0
            %s1488 = scalar_select %p1487, %s1481, 0
            %p1489 = scmp.lt.s32.totalorder %s1488, 15
            %s1490 = scalar_select %p1489, %s1488, 15
            %s1491 = smul.u32 %s1490, 9
            %s1492 = smul.addr %s1491, 4
            %s1493 = scalar_lea.vmem %s193, %s1492
            %v1494 = vld [vmem:[%s1493] sm:$0xff]
            %v1495 = vld [vmem:[%s1493 + $0x8] sm:$0xf]
            %v1496 = vld [vmem:[%s1493 + $0xc] sm:$0xff]
            %v1497 = vld [vmem:[%s1493 + $0x14] sm:$0xf]
            %v1498 = vld [vmem:[%s1493 + $0x18] sm:$0x11]
            %v1499 = vld [vmem:[%s1493 + $0x20] sm:$0x1]
            %v1500 = vunpack.c.l.bf16 %v1494
            %v1501 = vunpack.c.h.bf16 %v1494
            %v1502 = vunpack.c.l.bf16 %v1495
            %v1503 = vunpack.c.l.bf16 %v1496
            %v1504 = vunpack.c.h.bf16 %v1496
            %v1505 = vunpack.c.l.bf16 %v1497
            %v1506 = vunpack.c.l.bf16 %v1498
            %v1507 = vunpack.c.h.bf16 %v1498
            %v1508 = vunpack.c.l.bf16 %v1499
            %v1509 = vstv %s1486
            %v1510 = vmul.f32 %v243, %v1509
            %v1511 = vmul.f32 %v244, %v1509
            %v1514 = vlaneseq
            %v1515 = vshrl.u32 %v1514, 7
            %v1516 = vsub.s32 0, %v1515
            %v1517 = vrot.slane %v1510, %v1516
            %v1518 = vlaneseq
            %v1519 = vshrl.u32 %v1518, 7
            %v1520 = vsub.s32 4, %v1519
            %v1521 = vrot.slane %v1510, %v1520
            %v1522 = vlaneseq
            %v1523 = vshrl.u32 %v1522, 7
            %v1524 = vsub.s32 0, %v1523
            %v1525 = vrot.slane %v1511, %v1524
            %v1529 = vlaneseq
            %v1530 = vshrl.u32 %v1529, 7
            %v1531 = vsub.s32 0, %v1530
            %v1532 = vrot.slane %v1517, %v1531
            %v1533 = vlaneseq
            %v1534 = vshrl.u32 %v1533, 7
            %v1535 = vsub.s32 0, %v1534
            %v1536 = vrot.slane %v1521, %v1535
            %v1537 = vlaneseq
            %v1538 = vshrl.u32 %v1537, 7
            %v1539 = vsub.s32 0, %v1538
            %v1540 = vrot.slane %v1525, %v1539
            %v1541 = vmul.f32 %v1500, %v1532
            %v1542 = vmul.f32 %v1501, %v1536
            %v1543 = vmul.f32 %v1502, %v1540
            %v1544 = vmul.f32 %v1503, %v1532
            %v1545 = vmul.f32 %v1504, %v1536
            %v1546 = vmul.f32 %v1505, %v1540
            %v1547 = vadd.f32 %v1475, %v1541
            %v1548 = vadd.f32 %v1476, %v1542
            %v1549 = vadd.f32 %v1477, %v1543
            %v1550 = vadd.f32 %v1478, %v1544
            %v1551 = vadd.f32 %v1479, %v1545
            %v1552 = vadd.f32 %v1480, %v1546
            %v1553 = vlaneseq
            %v1554 = vshrl.u32 %v1553, 7
            %v1555 = vsub.s32 1, %v1554
            %v1556 = vrot.slane %v1510, %v1555
            %v1557 = vlaneseq
            %v1558 = vshrl.u32 %v1557, 7
            %v1559 = vsub.s32 5, %v1558
            %v1560 = vrot.slane %v1510, %v1559
            %v1561 = vlaneseq
            %v1562 = vshrl.u32 %v1561, 7
            %v1563 = vsub.s32 1, %v1562
            %v1564 = vrot.slane %v1511, %v1563
            %v1568 = vlaneseq
            %v1569 = vshrl.u32 %v1568, 7
            %v1570 = vsub.s32 1, %v1569
            %v1571 = vrot.slane %v1556, %v1570
            %v1572 = vlaneseq
            %v1573 = vshrl.u32 %v1572, 7
            %v1574 = vsub.s32 1, %v1573
            %v1575 = vrot.slane %v1560, %v1574
            %v1576 = vlaneseq
            %v1577 = vshrl.u32 %v1576, 7
            %v1578 = vsub.s32 1, %v1577
            %v1579 = vrot.slane %v1564, %v1578
            %v1580 = vmul.f32 %v1500, %v1571
            %v1581 = vmul.f32 %v1501, %v1575
            %v1582 = vmul.f32 %v1502, %v1579
            %v1583 = vmul.f32 %v1503, %v1571
            %v1584 = vmul.f32 %v1504, %v1575
            %v1585 = vmul.f32 %v1505, %v1579
            %v1586 = vmul.f32 %v1506, %v1571
            %v1587 = vmul.f32 %v1507, %v1575
            %v1588 = vmul.f32 %v1508, %v1579
            %v1598 = vrot.slane %v1580, 1
            %v1599 = vrot.slane %v1583, 1
            %v1600 = vsel %vm1165, %v1598, %v1599
            %v1601 = vrot.slane %v1581, 1
            %v1602 = vrot.slane %v1584, 1
            %v1603 = vsel %vm1165, %v1601, %v1602
            %v1604 = vrot.slane %v1582, 1
            %v1605 = vrot.slane %v1585, 1
            %v1606 = vsel %vm1165, %v1604, %v1605
            %v1607 = vrot.slane %v1586, 1
            %v1608 = vsel %vm1165, %v1599, %v1607
            %v1609 = vrot.slane %v1587, 1
            %v1610 = vsel %vm1165, %v1602, %v1609
            %v1611 = vrot.slane %v1588, 1
            %v1612 = vsel %vm1165, %v1605, %v1611
            %v1619 = vadd.f32 %v1547, %v1600
            %v1620 = vadd.f32 %v1548, %v1603
            %v1621 = vadd.f32 %v1549, %v1606
            %v1622 = vadd.f32 %v1550, %v1608
            %v1623 = vadd.f32 %v1551, %v1610
            %v1624 = vadd.f32 %v1552, %v1612
            %v1625 = vlaneseq
            %v1626 = vshrl.u32 %v1625, 7
            %v1627 = vsub.s32 2, %v1626
            %v1628 = vrot.slane %v1510, %v1627
            %v1629 = vlaneseq
            %v1630 = vshrl.u32 %v1629, 7
            %v1631 = vsub.s32 6, %v1630
            %v1632 = vrot.slane %v1510, %v1631
            %v1633 = vlaneseq
            %v1634 = vshrl.u32 %v1633, 7
            %v1635 = vsub.s32 2, %v1634
            %v1636 = vrot.slane %v1511, %v1635
            %v1640 = vlaneseq
            %v1641 = vshrl.u32 %v1640, 7
            %v1642 = vsub.s32 2, %v1641
            %v1643 = vrot.slane %v1628, %v1642
            %v1644 = vlaneseq
            %v1645 = vshrl.u32 %v1644, 7
            %v1646 = vsub.s32 2, %v1645
            %v1647 = vrot.slane %v1632, %v1646
            %v1648 = vlaneseq
            %v1649 = vshrl.u32 %v1648, 7
            %v1650 = vsub.s32 2, %v1649
            %v1651 = vrot.slane %v1636, %v1650
            %v1652 = vmul.f32 %v1500, %v1643
            %v1653 = vmul.f32 %v1501, %v1647
            %v1654 = vmul.f32 %v1502, %v1651
            %v1655 = vmul.f32 %v1503, %v1643
            %v1656 = vmul.f32 %v1504, %v1647
            %v1657 = vmul.f32 %v1505, %v1651
            %v1658 = vmul.f32 %v1506, %v1643
            %v1659 = vmul.f32 %v1507, %v1647
            %v1660 = vmul.f32 %v1508, %v1651
            %v1670 = vrot.slane %v1652, 2
            %v1671 = vrot.slane %v1655, 2
            %v1672 = vsel %vm1238, %v1670, %v1671
            %v1673 = vrot.slane %v1653, 2
            %v1674 = vrot.slane %v1656, 2
            %v1675 = vsel %vm1238, %v1673, %v1674
            %v1676 = vrot.slane %v1654, 2
            %v1677 = vrot.slane %v1657, 2
            %v1678 = vsel %vm1238, %v1676, %v1677
            %v1679 = vrot.slane %v1658, 2
            %v1680 = vsel %vm1238, %v1671, %v1679
            %v1681 = vrot.slane %v1659, 2
            %v1682 = vsel %vm1238, %v1674, %v1681
            %v1683 = vrot.slane %v1660, 2
            %v1684 = vsel %vm1238, %v1677, %v1683
            %v1691 = vadd.f32 %v1619, %v1672
            %v1692 = vadd.f32 %v1620, %v1675
            %v1693 = vadd.f32 %v1621, %v1678
            %v1694 = vadd.f32 %v1622, %v1680
            %v1695 = vadd.f32 %v1623, %v1682
            %v1696 = vadd.f32 %v1624, %v1684
            %v1698 = vlaneseq
            %v1699 = vshrl.u32 %v1698, 7
            %v1700 = vsub.s32 0, %v1699
            %v1701 = vrot.slane %v1038, %v1700
            %v1702 = vlaneseq
            %v1703 = vshrl.u32 %v1702, 7
            %v1704 = vsub.s32 1, %v1703
            %v1705 = vrot.slane %v1038, %v1704
            %v1706 = vlaneseq
            %v1707 = vshrl.u32 %v1706, 7
            %v1708 = vsub.s32 2, %v1707
            %v1709 = vrot.slane %v1038, %v1708
            %v1713 = vmul.f32 %v1691, %v1701
            %v1714 = vmul.f32 %v1692, %v1705
            %v1715 = vmul.f32 %v1693, %v1709
            %v1716 = vmul.f32 %v1694, %v1701
            %v1717 = vmul.f32 %v1695, %v1705
            %v1718 = vmul.f32 %v1696, %v1709
            %v1720 = vlaneseq
            %v1721 = vshrl.u32 %v1720, 7
            %v1722 = vsub.s32 0, %v1721
            %v1723 = vrot.slane %v1040, %v1722
            %v1724 = vlaneseq
            %v1725 = vshrl.u32 %v1724, 7
            %v1726 = vsub.s32 1, %v1725
            %v1727 = vrot.slane %v1040, %v1726
            %v1728 = vlaneseq
            %v1729 = vshrl.u32 %v1728, 7
            %v1730 = vsub.s32 2, %v1729
            %v1731 = vrot.slane %v1040, %v1730
            %v1735 = vadd.f32 %v1713, %v1723
            %v1736 = vadd.f32 %v1714, %v1727
            %v1737 = vadd.f32 %v1715, %v1731
            %v1738 = vadd.f32 %v1716, %v1723
            %v1739 = vadd.f32 %v1717, %v1727
            %v1740 = vadd.f32 %v1718, %v1731
            %s1741 = smul.u32 %s1042, 6
            %s1742 = smul.addr %s1741, 8
            %s1743 = scalar_lea.vmem %s188, %s1742 [#allocation4]
            %1744 = vst [vmem:[%s1743] sm:$0xff] %v1735
            %1745 = vst [vmem:[%s1743 + $0x8] sm:$0xff] %v1736
            %vm1746 = vcmask 261120
            %1747 = vst.msk [vmem:[%s1743 + $0x10] sm:$0xff] %vm1746, %v1737
            %1748 = vst [vmem:[%s1743 + $0x18] sm:$0xff] %v1738
            %1749 = vst [vmem:[%s1743 + $0x20] sm:$0xff] %v1739
            %1750 = vst.msk [vmem:[%s1743 + $0x28] sm:$0xff] %vm1746, %v1740
          $region60: #{depthwise_conv_bn.1} parent=54 // loop_footer
            %s1046 = sadd.s32 1, %s1042
          $region61: #{depthwise_conv_bn.1} parent=54 // loop_footer_branch
            %1041 = sbr.rel target = $region57
          $region62: #{depthwise_conv_bn.1} parent=54 // loop_exit
            _
        $region55: #{depthwise_conv_bn.1} parent=31 // pred_fallthru
          _
        %s1751 = sand.u32 %s118, 1
        %s1752 = scalar_lea.sflag [#allocation5], %s1751
        %s1753 = sand.u32 %s118, 1
        %s1754 = smul.addr %s1753, 384
        %s1755 = scalar_lea.vmem [#allocation4], %s1754
        // Predicated region
        $region63: #{depthwise_conv_bn.1} parent=31 // pred_check
          %p1756 = pneg %p128
        $region64: #{depthwise_conv_bn.1} parent=31 // pred_check_branch
          %1758 = sbr.rel (%p1756) target = $region66
        $region65: #{depthwise_conv_bn.1} parent=31 // pred_region
          %s1759 = smul.u32 %s22, %s23
          %s1760 = smul.u32 %s22, %s24
          %s1761 = smul.u32 8, %s1760
          %s1763 = ssub.s32 6144, 6144
          %1764 = vsyncadd %s1752, %s1763
          %s1765 = smul.addr %s1761, 6
          %s1766 = smul.addr %s1759, 96
          %s1767 = sadd.s32 %s1765, %s1766
          %s1768 = smul.addr %s1767, 128
          %s1769 = scalar_lea.hbm %s3, %s1768
          %s1770 = sshll.u32 %s1755, 4
          %s1771 = int_to_ptr.vmem [resolvable:$true] %s1770
          %1776 = dma.vmem_to_hbm [thread:$0]  %s1771, 6144, %s1769, %s1752, 384, 384, 24
        $region66: #{depthwise_conv_bn.1} parent=31 // pred_fallthru
          _
      $region32: #{depthwise_conv_bn.1} parent=5 // pred_fallthru
        _
      %p1777 = scmp.le.s32.totalorder 2, %s12
      // Predicated region
      $region67: #{depthwise_conv_bn.1} parent=5 // pred_check
        %p1778 = pneg %p1777
      $region68: #{depthwise_conv_bn.1} parent=5 // pred_check_branch
        %1780 = sbr.rel (%p1778) target = $region70
      $region69: #{depthwise_conv_bn.1} parent=5 // pred_region
        %s1781 = ssub.s32 %s12, 2
        // Predicated region
        $region71: #{depthwise_conv_bn.1} parent=69 // pred_check
          %p1782 = pneg %p134
        $region72: #{depthwise_conv_bn.1} parent=69 // pred_check_branch
          %1784 = sbr.rel (%p1782) target = $region74
        $region73: #{depthwise_conv_bn.1} parent=69 // pred_region
          %s1785 = sand.u32 %s119, 1
          %s1786 = scalar_lea.sflag [#allocation5], %s1785
          %s1787 = sand.u32 %s119, 1
          %s1788 = smul.addr %s1787, 384
          %s1789 = scalar_lea.vmem [#allocation4], %s1788
          %1790 = dma.done %s1786, 6144
        $region74: #{depthwise_conv_bn.1} parent=69 // pred_fallthru
          _
      $region70: #{depthwise_conv_bn.1} parent=5 // pred_fallthru
        _
    $region6: #{depthwise_conv_bn.1} parent=1 // loop_footer
      %s16 = sadd.s32 1, %s12
    $region7: #{depthwise_conv_bn.1} parent=1 // loop_footer_branch
      %11 = sbr.rel target = $region3
    $region8: #{depthwise_conv_bn.1} parent=1 // loop_exit
      _
    %1791 = vsyncpa [#allocation5], 1
    %s1792 = scalar_lea.sflag [#allocation5], 1
    %1793 = vsyncpa %s1792, 1

</llo_original>
